<compile_context>
chip_gen: v5e
topology: v5e:2x2
jax: 0.10.0
libtpu: 0.0.40
codegen_flags: <defaults>
</compile_context>

<pallas_src>
import functools

import jax
import jax.numpy as jnp
from jax.experimental import pallas as pl
from jax.experimental.pallas import tpu as pltpu

BN_EPS = 1e-5

_COMPILER_PARAMS = pltpu.CompilerParams(
    dimension_semantics=("parallel",),
    vmem_limit_bytes=32 * 1024 * 1024,
)


# --------------------------------------------------------------------------
# Pallas kernels
# --------------------------------------------------------------------------
def _conv3x3_kernel(*refs, apply_affine):
    """[optional f32 affine+ReLU prologue] -> 3x3 conv as 3 full-M banded dots.

    Per grid step (block of Nb images):
      x_ref : (Nb, H, W*Ci)   bf16 lane-flattened NHWC activation
      g/d   : (Nb, 1, W*Ci)   f32 per-image per-channel affine, tiled over W
      w_ref : (3, W*Ci, W*Co) bf16 banded conv weights (ky = 0,1,2)
      b_ref : (1, W*Co)       f32 conv bias tiled over W
      o_ref : (Nb, H, W*Co)   bf16
      s/ss  : (1, 1, W*Co)    f32 block partial sum / sum-of-squares (for BN)
    """
    if apply_affine:
        x_ref, g_ref, d_ref, w_ref, b_ref, o_ref, s_ref, ss_ref = refs
    else:
        x_ref, w_ref, b_ref, o_ref, s_ref, ss_ref = refs

    nb, H, wci = x_ref.shape
    wco = o_ref.shape[-1]
    m = nb * H

    a = x_ref[...]
    if apply_affine:  # fused BN1-apply + (scale+1)/shift + ReLU, in f32 on the VPU
        a = jnp.maximum(a.astype(jnp.float32) * g_ref[...] + d_ref[...], 0.0)
        a = a.astype(jnp.bfloat16)
    am = a.reshape(m, wci)

    # Three full-M MXU dots; horizontal taps + SAME padding are baked into the
    # banded weights. Vertical taps: shift the band results one row and mask rows
    # that would cross an image boundary (replaces the old xpad scratch copy).
    c = jnp.dot(am, w_ref[1], preferred_element_type=jnp.float32)
    u = jnp.dot(am, w_ref[0], preferred_element_type=jnp.float32)   # -> row r+1
    dn = jnp.dot(am, w_ref[2], preferred_element_type=jnp.float32)  # -> row r-1

    zero_row = jnp.zeros((1, wco), jnp.float32)
    u_sh = jnp.concatenate([zero_row, u[:m - 1, :]], axis=0)
    d_sh = jnp.concatenate([dn[1:, :], zero_row], axis=0)
    if nb > 1:  # zero contributions that would leak across image boundaries
        r = jax.lax.broadcasted_iota(jnp.int32, (m, wco), 0) % H
        u_sh = jnp.where(r != 0, u_sh, 0.0)
        d_sh = jnp.where(r != H - 1, d_sh, 0.0)

    acc = c + u_sh + d_sh + b_ref[...]

    o_ref[...] = acc.reshape(nb, H, wco).astype(o_ref.dtype)
    # per-block partial sums for BN (sublane reduce only; the tiny cross-block /
    # cross-column reduce happens in the wrapper on (nblk, 1, W*Co) arrays).
    s_ref[...] = jnp.sum(acc, axis=0, keepdims=True).reshape(s_ref.shape)
    ss_ref[...] = jnp.sum(acc * acc, axis=0, keepdims=True).reshape(ss_ref.shape)


def _bn_relu_residual_kernel(h_ref, g_ref, d_ref, x_ref, rw_ref, rb_ref, o_ref):
    """out = relu(h*g + d) + (x @ blockdiag(res_w)) + res_bias (fused final stage)."""
    nb, H, wco = h_ref.shape
    wci = x_ref.shape[-1]
    a = jnp.maximum(h_ref[...].astype(jnp.float32) * g_ref[...] + d_ref[...], 0.0)
    res = jnp.dot(x_ref[...].reshape(nb * H, wci), rw_ref[...],
                  preferred_element_type=jnp.float32)
    o_ref[...] = (a + res.reshape(nb, H, wco) + rb_ref[...]).astype(o_ref.dtype)


# --------------------------------------------------------------------------
# pallas_call wrappers
# --------------------------------------------------------------------------
def _pick_nb(n, h, target_rows=256):
    """Largest divisor of n with nb*h <= target_rows, preferring >=2 grid steps."""
    divisors = [d for d in range(1, n + 1) if n % d == 0]
    cands = [d for d in divisors if d * h <= target_rows] or [1]
    multi = [d for d in cands if n // d >= 2]
    if multi and multi[-1] * h >= 128:
        return multi[-1]
    return cands[-1]


def _conv3x3_bn_stats(x_flat, wband, bias_t, nb, g=None, d=None):
    """Nb images per grid step: optional affine+ReLU prologue, 3x3 conv, BN stats."""
    N, H, WCi = x_flat.shape
    WCo = wband.shape[-1]
    nblk = N // nb
    apply_affine = g is not None
    kernel = functools.partial(_conv3x3_kernel, apply_affine=apply_affine)

    in_specs = [pl.BlockSpec((nb, H, WCi), lambda n: (n, 0, 0))]
    operands = [x_flat]
    if apply_affine:
        in_specs += [pl.BlockSpec((nb, 1, WCi), lambda n: (n, 0, 0)),
                     pl.BlockSpec((nb, 1, WCi), lambda n: (n, 0, 0))]
        operands += [g, d]
    # TODO(synk): pipeline_mode=pl.Buffered(1) on these constant-index weight specs
    # (single-buffer resident weights, halves their VMEM on v7x) once verified.
    in_specs += [pl.BlockSpec((3, WCi, WCo), lambda n: (0, 0, 0)),
                 pl.BlockSpec((1, WCo), lambda n: (0, 0))]
    operands += [wband, bias_t]

    return pl.pallas_call(
        kernel,
        out_shape=(jax.ShapeDtypeStruct((N, H, WCo), jnp.bfloat16),
                   jax.ShapeDtypeStruct((nblk, 1, WCo), jnp.float32),
                   jax.ShapeDtypeStruct((nblk, 1, WCo), jnp.float32)),
        grid=(nblk,),
        in_specs=in_specs,
        out_specs=(pl.BlockSpec((nb, H, WCo), lambda n: (n, 0, 0)),
                   pl.BlockSpec((1, 1, WCo), lambda n: (n, 0, 0)),
                   pl.BlockSpec((1, 1, WCo), lambda n: (n, 0, 0))),
        compiler_params=_COMPILER_PARAMS,
    )(*operands)


def _bn_relu_residual(h2, g2t, d2t, x_flat, rband, rbias_t, nb):
    N, H, WCo = h2.shape
    WCi = x_flat.shape[-1]
    nblk = N // nb
    return pl.pallas_call(
        _bn_relu_residual_kernel,
        out_shape=jax.ShapeDtypeStruct((N, H, WCo), jnp.float32),
        grid=(nblk,),
        in_specs=[pl.BlockSpec((nb, H, WCo), lambda n: (n, 0, 0)),
                  pl.BlockSpec((1, WCo), lambda n: (0, 0)),
                  pl.BlockSpec((1, WCo), lambda n: (0, 0)),
                  pl.BlockSpec((nb, H, WCi), lambda n: (n, 0, 0)),
                  pl.BlockSpec((WCi, WCo), lambda n: (0, 0)),
                  pl.BlockSpec((1, WCo), lambda n: (0, 0))],
        out_specs=pl.BlockSpec((nb, H, WCo), lambda n: (n, 0, 0)),
        compiler_params=_COMPILER_PARAMS,
    )(h2, g2t, d2t, x_flat, rband, rbias_t)


# --------------------------------------------------------------------------
# Parameter preparation (done ONCE, outside the per-step jitted forward)
# --------------------------------------------------------------------------
def _banded_conv_weight(w, W):
    """(3,3,Ci,Co) conv weight -> (3, W*Ci, W*Co) banded matrices.

    band[ky][(x+kx-1)*Ci + c, x*Co + co] = w[ky, kx, c, co]; rows for out-of-range
    x+kx-1 simply don't exist -> horizontal SAME padding.
    TODO(synk): O(W^2) in memory/FLOPs; only valid for small W*C (see header note).
    """
    kh, kw, Ci, Co = w.shape
    K = kw * Ci
    wk = w.reshape(kh, K, Co)
    j = jnp.arange(W * Ci)
    x = jnp.arange(W)
    rel = j[None, :] - (x[:, None] - 1) * Ci                 # (W, W*Ci)
    valid = (rel >= 0) & (rel < K)
    relc = jnp.clip(rel, 0, K - 1)
    blocks = jnp.where(valid[None, :, :, None], wk[:, relc, :], 0.0)  # (kh,W,W*Ci,Co)
    return blocks.transpose(0, 2, 1, 3).reshape(kh, W * Ci, W * Co)


def _blockdiag_1x1_weight(rw, W):
    """(Ci,Co) 1x1-conv weight -> (W*Ci, W*Co) block-diagonal matrix."""
    return jnp.kron(jnp.eye(W, dtype=rw.dtype), rw)


def _tile_w(v, W):
    """Tile a (.., C) per-channel row vector to the (.., W*C) flattened layout."""
    return jnp.tile(v, (1, W))


def prepare_params(params, W):
    """Precompute banded/tiled weights once (review #8). MXU operands in bf16."""
    prep = {
        "wband1": _banded_conv_weight(params["w1"], W).astype(jnp.bfloat16),
        "wband2": _banded_conv_weight(params["w2"], W).astype(jnp.bfloat16),
        "b1t": _tile_w(params["b1"], W),
        "b2t": _tile_w(params["b2"], W),
        "rband": _blockdiag_1x1_weight(params["res_w"], W).astype(jnp.bfloat16),
        "rbt": _tile_w(params["res_b"], W),
        "bn1_g": params["bn1_gamma"], "bn1_b": params["bn1_beta"],
        "bn2_g": params["bn2_gamma"], "bn2_b": params["bn2_beta"],
    }
    if "mlp_w" in params:
        prep["mlp_w"] = params["mlp_w"]
        prep["mlp_b"] = params["mlp_b"]
    return prep


def _batch_stats(s, ss, c_out, count):
    tot = s.reshape(s.shape[0], -1, c_out).sum(axis=(0, 1))
    tot2 = ss.reshape(ss.shape[0], -1, c_out).sum(axis=(0, 1))
    mean = tot / count
    # E[x^2]-E[x]^2 in f32 can go slightly negative -> clamp before rsqrt.
    var = jnp.maximum(tot2 / count - mean * mean, 0.0)
    return mean, jax.lax.rsqrt(var + BN_EPS)


# --------------------------------------------------------------------------
# Forward pass
# --------------------------------------------------------------------------
def unet_conv_block_nhwc(prep, x_nhwc, time_emb=None):
    """NHWC-native UNetConvBlock forward. x: (N, H, W, Cin) -> (N, H, W, Cout)."""
    N, H, W, Cin = x_nhwc.shape
    Cout = prep["b1t"].shape[-1] // W
    nb = _pick_nb(N, H)
    x_flat = x_nhwc.reshape(N, H, W * Cin).astype(jnp.bfloat16)   # lane-flattened

    if ("mlp_w" in prep) and (time_emb is not None):
        # Tiny (N,T)@(T,2*Cout) matmul: plain XLA (cheaper than pallas_call overhead).
        te = jnp.dot(jnp.maximum(time_emb, 0.0), prep["mlp_w"],
                     precision=jax.lax.Precision.HIGHEST) + prep["mlp_b"]
        scale, shift = te[:, :Cout], te[:, Cout:]
    else:
        scale = jnp.zeros((N, Cout), jnp.float32)
        shift = jnp.zeros((N, Cout), jnp.float32)

    count = float(N * H * W)

    # ---- block1: conv3x3 (+ BN partial sums) ------------------------------
    h1, s1, ss1 = _conv3x3_bn_stats(x_flat, prep["wband1"], prep["b1t"], nb)
    mean1, inv1 = _batch_stats(s1, ss1, Cout, count)
    # fold BN1 (gamma/beta) + (scale+1)/shift into one per-image per-channel affine
    ig1 = inv1 * prep["bn1_g"]                                  # (Cout,)
    g1 = ig1[None, :] * (scale + 1.0)                           # (N, Cout)
    d1 = (prep["bn1_b"] - mean1 * ig1)[None, :] * (scale + 1.0) + shift
    g1t = _tile_w(g1, W).reshape(N, 1, W * Cout)
    d1t = _tile_w(d1, W).reshape(N, 1, W * Cout)

    # ---- block2: fused [BN1+scale/shift+ReLU] -> conv3x3 (+ partial sums) --
    h2, s2, ss2 = _conv3x3_bn_stats(h1, prep["wband2"], prep["b2t"], nb, g1t, d1t)
    mean2, inv2 = _batch_stats(s2, ss2, Cout, count)
    ig2 = inv2 * prep["bn2_g"]
    g2t = _tile_w(ig2.reshape(1, Cout), W)                       # (1, W*Cout)
    d2t = _tile_w((prep["bn2_b"] - mean2 * ig2).reshape(1, Cout), W)

    # ---- fused [BN2+ReLU] + residual 1x1 conv + add ------------------------
    out_flat = _bn_relu_residual(h2, g2t, d2t, x_flat, prep["rband"], prep["rbt"], nb)
    return out_flat.reshape(N, H, W, Cout)


def unet_conv_block(prep, x_nchw, time_emb=None):
    """NCHW interface for parity with the PyTorch module.

    TODO(synk): keep the surrounding model in NHWC to drop these two full HBM
    transpose passes (review #6); the Pallas core is NHWC-native.
    """
    x = jnp.transpose(x_nchw, (0, 2, 3, 1))
    out = unet_conv_block_nhwc(prep, x, time_emb)
    return jnp.transpose(out, (0, 3, 1, 2))


# --------------------------------------------------------------------------
# Deterministic parameter construction (synthetic, no checkpoint load)
# --------------------------------------------------------------------------
def init_params(key, in_size, out_size, time_emb_dim=None):
    ks = jax.random.split(key, 12)
    p = {
        "w1": 0.1 * jax.random.normal(ks[0], (3, 3, in_size, out_size), jnp.float32),
        "b1": 0.1 * jax.random.normal(ks[1], (1, out_size), jnp.float32),
        "w2": 0.1 * jax.random.normal(ks[2], (3, 3, out_size, out_size), jnp.float32),
        "b2": 0.1 * jax.random.normal(ks[3], (1, out_size), jnp.float32),
        # BatchNorm2d(affine=True): PyTorch init is gamma=1, beta=0; perturbed here
        # so the gamma/beta folding path is actually exercised by the check.
        "bn1_gamma": 1.0 + 0.1 * jax.random.normal(ks[4], (out_size,), jnp.float32),
        "bn1_beta": 0.1 * jax.random.normal(ks[5], (out_size,), jnp.float32),
        "bn2_gamma": 1.0 + 0.1 * jax.random.normal(ks[6], (out_size,), jnp.float32),
        "bn2_beta": 0.1 * jax.random.normal(ks[7], (out_size,), jnp.float32),
    }
    if in_size != out_size:
        p["res_w"] = 0.1 * jax.random.normal(ks[8], (in_size, out_size), jnp.float32)
        p["res_b"] = 0.1 * jax.random.normal(ks[9], (1, out_size), jnp.float32)
    else:  # nn.Identity() expressed as an identity 1x1 conv (same kernel reused)
        p["res_w"] = jnp.eye(in_size, dtype=jnp.float32)
        p["res_b"] = jnp.zeros((1, out_size), jnp.float32)
    if time_emb_dim is not None:
        p["mlp_w"] = 0.1 * jax.random.normal(ks[10], (time_emb_dim, 2 * out_size), jnp.float32)
        p["mlp_b"] = 0.1 * jax.random.normal(ks[11], (1, 2 * out_size), jnp.float32)
    return p


# --------------------------------------------------------------------------
# Pure-JAX reference (correctness check only)
# --------------------------------------------------------------------------
def _ref_forward(params, x_nchw, time_emb):
    HI = jax.lax.Precision.HIGHEST
    x = jnp.transpose(x_nchw, (0, 2, 3, 1))
    Cout = params["w1"].shape[-1]
    te = jnp.dot(jnp.maximum(time_emb, 0.0), params["mlp_w"],
                 precision=HI) + params["mlp_b"]
    scale, shift = te[:, :Cout], te[:, Cout:]

    def conv(a, w, b):
        y = jax.lax.conv_general_dilated(
            a, w, (1, 1), "SAME",
            dimension_numbers=("NHWC", "HWIO", "NHWC"), precision=HI)
        return y + b.reshape(1, 1, 1, -1)

    def bn(y, gamma, beta):
        m = jnp.mean(y, axis=(0, 1, 2), keepdims=True)
        v = jnp.mean((y - m) ** 2, axis=(0, 1, 2), keepdims=True)
        return (y - m) / jnp.sqrt(v + BN_EPS) * gamma + beta

    h = bn(conv(x, params["w1"], params["b1"]), params["bn1_gamma"], params["bn1_beta"])
    h = h * (scale[:, None, None, :] + 1.0) + shift[:, None, None, :]
    h = jnp.maximum(h, 0.0)
    h = jnp.maximum(bn(conv(h, params["w2"], params["b2"]),
                       params["bn2_gamma"], params["bn2_beta"]), 0.0)
    res = jnp.einsum("nhwc,cd->nhwd", x, params["res_w"], precision=HI) \
        + params["res_b"].reshape(1, 1, 1, -1)
    return jnp.transpose(h + res, (0, 3, 1, 2))


# --------------------------------------------------------------------------
if __name__ == "__main__":
    key = jax.random.PRNGKey(0)
    k_x, k_t, k_p = jax.random.split(key, 3)

    N, Cin, Cout, H, W, T = 2, 4, 8, 16, 16, 32
    x = jax.random.normal(k_x, (N, Cin, H, W), jnp.float32)
    time_emb = jax.random.normal(k_t, (N, T), jnp.float32)
    params = init_params(k_p, Cin, Cout, time_emb_dim=T)

    prep = prepare_params(params, W)          # built once, not per forward
    fwd = jax.jit(unet_conv_block)
    out = jax.block_until_ready(fwd(prep, x, time_emb))
    assert out.shape == (N, Cout, H, W), out.shape
    assert bool(jnp.all(jnp.isfinite(out)))

    # bf16 activations/weights on the MXU path -> compare against the f32
    # reference with a scale-relative tolerance (per review correctness note).
    ref = _ref_forward(params, x, time_emb)
    err = float(jnp.max(jnp.abs(out - ref)))
    tol = 0.05 * float(jnp.max(jnp.abs(ref))) + 1e-2
    assert err < tol, (err, tol)

    print("KERNEL_OK")
</pallas_src>

<mosaic_0001>
module attributes {stable_mosaic.version = 11 : i64} {
  func.func @_conv3x3_kernel(%arg0: i32, %arg1: memref<2x16x64xbf16, #tpu.memory_space<vmem>>, %arg2: memref<3x64x128xbf16, #tpu.memory_space<vmem>>, %arg3: memref<1x128xf32, #tpu.memory_space<vmem>>, %arg4: memref<2x16x128xbf16, #tpu.memory_space<vmem>>, %arg5: memref<1x1x128xf32, #tpu.memory_space<vmem>>, %arg6: memref<1x1x128xf32, #tpu.memory_space<vmem>>) attributes {dimension_semantics = [#tpu.dimension_semantics<parallel>], iteration_bounds = array<i64: 1>, scalar_prefetch = 0 : i64, scratch_operands = 0 : i64, tpu.core_type = #tpu.core_type<tc>, window_params = [{transform_indices = @transform_0, window_bounds = array<i64: 2, 16, 64>}, {pipeline_mode = #tpu.pipeline_mode<synchronous>, transform_indices = @transform_1, window_bounds = array<i64: 3, 64, 128>}, {pipeline_mode = #tpu.pipeline_mode<synchronous>, transform_indices = @transform_2, window_bounds = array<i64: 1, 128>}, {transform_indices = @transform_3, window_bounds = array<i64: 2, 16, 128>}, {transform_indices = @transform_4, window_bounds = array<i64: 1, 1, 128>}, {transform_indices = @transform_5, window_bounds = array<i64: 1, 1, 128>}]} {
    %c0 = arith.constant 0 : index
    %c0_0 = arith.constant 0 : index
    %c0_1 = arith.constant 0 : index
    %0 = vector.load %arg1[%c0, %c0_0, %c0_1] : memref<2x16x64xbf16, #tpu.memory_space<vmem>>, vector<2x16x64xbf16>
    %1 = vector.shape_cast %0 : vector<2x16x64xbf16> to vector<32x64xbf16>
    %c1 = arith.constant 1 : index
    %c0_2 = arith.constant 0 : index
    %c0_3 = arith.constant 0 : index
    %2 = vector.load %arg2[%c1, %c0_2, %c0_3] : memref<3x64x128xbf16, #tpu.memory_space<vmem>>, vector<1x64x128xbf16>
    %3 = vector.shape_cast %2 : vector<1x64x128xbf16> to vector<64x128xbf16>
    %cst = arith.constant dense<0.000000e+00> : vector<32x128xf32>
    %4 = tpu.matmul %1, %3, %cst {dimension_numbers = #tpu.dot_dimension_numbers<[1], [0], [0], [1], [0, 0, 1, 1], [], []>} : vector<32x64xbf16>, vector<64x128xbf16>, vector<32x128xf32> -> vector<32x128xf32>
    %c0_4 = arith.constant 0 : index
    %c0_5 = arith.constant 0 : index
    %c0_6 = arith.constant 0 : index
    %5 = vector.load %arg2[%c0_4, %c0_5, %c0_6] : memref<3x64x128xbf16, #tpu.memory_space<vmem>>, vector<1x64x128xbf16>
    %6 = vector.shape_cast %5 : vector<1x64x128xbf16> to vector<64x128xbf16>
    %cst_7 = arith.constant dense<0.000000e+00> : vector<32x128xf32>
    %7 = tpu.matmul %1, %6, %cst_7 {dimension_numbers = #tpu.dot_dimension_numbers<[1], [0], [0], [1], [0, 0, 1, 1], [], []>} : vector<32x64xbf16>, vector<64x128xbf16>, vector<32x128xf32> -> vector<32x128xf32>
    %c2 = arith.constant 2 : index
    %c0_8 = arith.constant 0 : index
    %c0_9 = arith.constant 0 : index
    %8 = vector.load %arg2[%c2, %c0_8, %c0_9] : memref<3x64x128xbf16, #tpu.memory_space<vmem>>, vector<1x64x128xbf16>
    %9 = vector.shape_cast %8 : vector<1x64x128xbf16> to vector<64x128xbf16>
    %cst_10 = arith.constant dense<0.000000e+00> : vector<32x128xf32>
    %10 = tpu.matmul %1, %9, %cst_10 {dimension_numbers = #tpu.dot_dimension_numbers<[1], [0], [0], [1], [0, 0, 1, 1], [], []>} : vector<32x64xbf16>, vector<64x128xbf16>, vector<32x128xf32> -> vector<32x128xf32>
    %cst_11 = arith.constant 0.000000e+00 : f32
    %11 = vector.broadcast %cst_11 : f32 to vector<1x128xf32>
    %12 = vector.extract_strided_slice %7 {offsets = [0, 0], sizes = [31, 128], strides = [1, 1]} : vector<32x128xf32> to vector<31x128xf32>
    %13 = tpu.concatenate %11, %12 in 0 : vector<1x128xf32>, vector<31x128xf32> -> vector<32x128xf32>
    %14 = vector.extract_strided_slice %10 {offsets = [1, 0], sizes = [31, 128], strides = [1, 1]} : vector<32x128xf32> to vector<31x128xf32>
    %15 = tpu.concatenate %14, %11 in 0 : vector<31x128xf32>, vector<1x128xf32> -> vector<32x128xf32>
    %16 = tpu.iota {dimensions = array<i32: 0>} : vector<32x128xi32>
    %c16_i32 = arith.constant 16 : i32
    %c0_i32 = arith.constant 0 : i32
    %17 = arith.cmpi eq, %c16_i32, %c0_i32 : i32
    %c1_i32 = arith.constant 1 : i32
    %18 = arith.select %17, %c1_i32, %c16_i32 : i32
    %19 = vector.broadcast %18 : i32 to vector<32x128xi32>
    %20 = arith.remsi %16, %19 : vector<32x128xi32>
    %c0_i32_12 = arith.constant 0 : i32
    %21 = vector.broadcast %c0_i32_12 : i32 to vector<32x128xi32>
    %22 = arith.cmpi ne, %20, %21 : vector<32x128xi32>
    %c0_i32_13 = arith.constant 0 : i32
    %23 = vector.broadcast %c0_i32_13 : i32 to vector<32x128xi32>
    %24 = arith.cmpi slt, %20, %23 : vector<32x128xi32>
    %c0_i32_14 = arith.constant 0 : i32
    %25 = arith.cmpi slt, %18, %c0_i32_14 : i32
    %26 = vector.broadcast %25 : i1 to vector<32x128xi1>
    %27 = vector.broadcast %26 : vector<32x128xi1> to vector<32x128xi1>
    %28 = arith.xori %24, %27 : vector<32x128xi1>
    %29 = arith.andi %28, %22 : vector<32x128xi1>
    %30 = vector.broadcast %18 : i32 to vector<32x128xi32>
    %31 = arith.addi %20, %30 : vector<32x128xi32>
    %32 = arith.select %29, %31, %20 : vector<32x128xi1>, vector<32x128xi32>
    %c0_i32_15 = arith.constant 0 : i32
    %33 = vector.broadcast %c0_i32_15 : i32 to vector<32x128xi32>
    %34 = arith.cmpi ne, %32, %33 : vector<32x128xi32>
    %cst_16 = arith.constant 0.000000e+00 : f32
    %35 = vector.broadcast %cst_16 : f32 to vector<32x128xf32>
    %36 = arith.select %34, %13, %35 : vector<32x128xi1>, vector<32x128xf32>
    %c15_i32 = arith.constant 15 : i32
    %37 = vector.broadcast %c15_i32 : i32 to vector<32x128xi32>
    %38 = arith.cmpi ne, %32, %37 : vector<32x128xi32>
    %cst_17 = arith.constant 0.000000e+00 : f32
    %39 = vector.broadcast %cst_17 : f32 to vector<32x128xf32>
    %40 = arith.select %38, %15, %39 : vector<32x128xi1>, vector<32x128xf32>
    %41 = arith.addf %4, %36 : vector<32x128xf32>
    %42 = arith.addf %41, %40 : vector<32x128xf32>
    %c0_18 = arith.constant 0 : index
    %c0_19 = arith.constant 0 : index
    %43 = vector.load %arg3[%c0_18, %c0_19] : memref<1x128xf32, #tpu.memory_space<vmem>>, vector<1x128xf32>
    %44 = vector.broadcast %43 : vector<1x128xf32> to vector<32x128xf32>
    %45 = arith.addf %42, %44 : vector<32x128xf32>
    %46 = vector.shape_cast %45 : vector<32x128xf32> to vector<2x16x128xf32>
    %47 = arith.truncf %46 : vector<2x16x128xf32> to vector<2x16x128xbf16>
    %c0_20 = arith.constant 0 : index
    %c0_21 = arith.constant 0 : index
    %c0_22 = arith.constant 0 : index
    %48 = vector.load %arg4[%c0_20, %c0_21, %c0_22] : memref<2x16x128xbf16, #tpu.memory_space<vmem>>, vector<2x16x128xbf16>
    tpu.vector_store %arg4[%c0_20, %c0_21, %c0_22], %47 {strides = array<i32>} : memref<2x16x128xbf16, #tpu.memory_space<vmem>>, vector<2x16x128xbf16>,
    %cst_23 = arith.constant dense<0.000000e+00> : vector<128xf32>
    %49 = vector.multi_reduction <add>, %45, %cst_23 [0] : vector<32x128xf32> to vector<128xf32>
    %50 = vector.shape_cast %49 : vector<128xf32> to vector<1x128xf32>
    %51 = vector.shape_cast %50 : vector<1x128xf32> to vector<1x1x128xf32>
    %c0_24 = arith.constant 0 : index
    %c0_25 = arith.constant 0 : index
    %c0_26 = arith.constant 0 : index
    %52 = vector.load %arg5[%c0_24, %c0_25, %c0_26] : memref<1x1x128xf32, #tpu.memory_space<vmem>>, vector<1x1x128xf32>
    tpu.vector_store %arg5[%c0_24, %c0_25, %c0_26], %51 {strides = array<i32>} : memref<1x1x128xf32, #tpu.memory_space<vmem>>, vector<1x1x128xf32>,
    %53 = arith.mulf %45, %45 : vector<32x128xf32>
    %cst_27 = arith.constant dense<0.000000e+00> : vector<128xf32>
    %54 = vector.multi_reduction <add>, %53, %cst_27 [0] : vector<32x128xf32> to vector<128xf32>
    %55 = vector.shape_cast %54 : vector<128xf32> to vector<1x128xf32>
    %56 = vector.shape_cast %55 : vector<1x128xf32> to vector<1x1x128xf32>
    %c0_28 = arith.constant 0 : index
    %c0_29 = arith.constant 0 : index
    %c0_30 = arith.constant 0 : index
    %57 = vector.load %arg6[%c0_28, %c0_29, %c0_30] : memref<1x1x128xf32, #tpu.memory_space<vmem>>, vector<1x1x128xf32>
    tpu.vector_store %arg6[%c0_28, %c0_29, %c0_30], %56 {strides = array<i32>} : memref<1x1x128xf32, #tpu.memory_space<vmem>>, vector<1x1x128xf32>,
    return
  }
  func.func @transform_0(%arg0: i32) -> (i32, i32, i32) {
    %c0_i32 = arith.constant 0 : i32
    %c0_i32_0 = arith.constant 0 : i32
    %c0_i32_1 = arith.constant 0 : i32
    return %arg0, %c0_i32, %c0_i32_0 : i32, i32, i32
  }
  func.func @transform_1(%arg0: i32) -> (i32, i32, i32) {
    %c0_i32 = arith.constant 0 : i32
    %c0_i32_0 = arith.constant 0 : i32
    %c0_i32_1 = arith.constant 0 : i32
    %c0_i32_2 = arith.constant 0 : i32
    return %c0_i32, %c0_i32_0, %c0_i32_1 : i32, i32, i32
  }
  func.func @transform_2(%arg0: i32) -> (i32, i32) {
    %c0_i32 = arith.constant 0 : i32
    %c0_i32_0 = arith.constant 0 : i32
    %c0_i32_1 = arith.constant 0 : i32
    return %c0_i32, %c0_i32_0 : i32, i32
  }
  func.func @transform_3(%arg0: i32) -> (i32, i32, i32) {
    %c0_i32 = arith.constant 0 : i32
    %c0_i32_0 = arith.constant 0 : i32
    %c0_i32_1 = arith.constant 0 : i32
    return %arg0, %c0_i32, %c0_i32_0 : i32, i32, i32
  }
  func.func @transform_4(%arg0: i32) -> (i32, i32, i32) {
    %c0_i32 = arith.constant 0 : i32
    %c0_i32_0 = arith.constant 0 : i32
    %c0_i32_1 = arith.constant 0 : i32
    return %arg0, %c0_i32, %c0_i32_0 : i32, i32, i32
  }
  func.func @transform_5(%arg0: i32) -> (i32, i32, i32) {
    %c0_i32 = arith.constant 0 : i32
    %c0_i32_0 = arith.constant 0 : i32
    %c0_i32_1 = arith.constant 0 : i32
    return %arg0, %c0_i32, %c0_i32_0 : i32, i32, i32
  }
}

module attributes {stable_mosaic.version = 11 : i64} {
  func.func @_bn_relu_residual_kernel(%arg0: i32, %arg1: memref<2x16x128xbf16, #tpu.memory_space<vmem>>, %arg2: memref<1x128xf32, #tpu.memory_space<vmem>>, %arg3: memref<1x128xf32, #tpu.memory_space<vmem>>, %arg4: memref<2x16x64xbf16, #tpu.memory_space<vmem>>, %arg5: memref<64x128xbf16, #tpu.memory_space<vmem>>, %arg6: memref<1x128xf32, #tpu.memory_space<vmem>>, %arg7: memref<2x16x128xf32, #tpu.memory_space<vmem>>) attributes {dimension_semantics = [#tpu.dimension_semantics<parallel>], iteration_bounds = array<i64: 1>, scalar_prefetch = 0 : i64, scratch_operands = 0 : i64, tpu.core_type = #tpu.core_type<tc>, window_params = [{transform_indices = @transform_0, window_bounds = array<i64: 2, 16, 128>}, {pipeline_mode = #tpu.pipeline_mode<synchronous>, transform_indices = @transform_1, window_bounds = array<i64: 1, 128>}, {pipeline_mode = #tpu.pipeline_mode<synchronous>, transform_indices = @transform_2, window_bounds = array<i64: 1, 128>}, {transform_indices = @transform_3, window_bounds = array<i64: 2, 16, 64>}, {pipeline_mode = #tpu.pipeline_mode<synchronous>, transform_indices = @transform_4, window_bounds = array<i64: 64, 128>}, {pipeline_mode = #tpu.pipeline_mode<synchronous>, transform_indices = @transform_5, window_bounds = array<i64: 1, 128>}, {transform_indices = @transform_6, window_bounds = array<i64: 2, 16, 128>}]} {
    %c0 = arith.constant 0 : index
    %c0_0 = arith.constant 0 : index
    %c0_1 = arith.constant 0 : index
    %0 = vector.load %arg1[%c0, %c0_0, %c0_1] : memref<2x16x128xbf16, #tpu.memory_space<vmem>>, vector<2x16x128xbf16>
    %1 = arith.extf %0 : vector<2x16x128xbf16> to vector<2x16x128xf32>
    %c0_2 = arith.constant 0 : index
    %c0_3 = arith.constant 0 : index
    %2 = vector.load %arg2[%c0_2, %c0_3] : memref<1x128xf32, #tpu.memory_space<vmem>>, vector<1x128xf32>
    %3 = vector.shape_cast %2 : vector<1x128xf32> to vector<1x1x128xf32>
    %4 = vector.broadcast %3 : vector<1x1x128xf32> to vector<2x16x128xf32>
    %5 = arith.mulf %1, %4 : vector<2x16x128xf32>
    %c0_4 = arith.constant 0 : index
    %c0_5 = arith.constant 0 : index
    %6 = vector.load %arg3[%c0_4, %c0_5] : memref<1x128xf32, #tpu.memory_space<vmem>>, vector<1x128xf32>
    %7 = vector.shape_cast %6 : vector<1x128xf32> to vector<1x1x128xf32>
    %8 = vector.broadcast %7 : vector<1x1x128xf32> to vector<2x16x128xf32>
    %9 = arith.addf %5, %8 : vector<2x16x128xf32>
    %cst = arith.constant 0.000000e+00 : f32
    %10 = vector.broadcast %cst : f32 to vector<2x16x128xf32>
    %11 = arith.maximumf %9, %10 : vector<2x16x128xf32>
    %c0_6 = arith.constant 0 : index
    %c0_7 = arith.constant 0 : index
    %c0_8 = arith.constant 0 : index
    %12 = vector.load %arg4[%c0_6, %c0_7, %c0_8] : memref<2x16x64xbf16, #tpu.memory_space<vmem>>, vector<2x16x64xbf16>
    %13 = vector.shape_cast %12 : vector<2x16x64xbf16> to vector<32x64xbf16>
    %c0_9 = arith.constant 0 : index
    %c0_10 = arith.constant 0 : index
    %14 = vector.load %arg5[%c0_9, %c0_10] : memref<64x128xbf16, #tpu.memory_space<vmem>>, vector<64x128xbf16>
    %cst_11 = arith.constant dense<0.000000e+00> : vector<32x128xf32>
    %15 = tpu.matmul %13, %14, %cst_11 {dimension_numbers = #tpu.dot_dimension_numbers<[1], [0], [0], [1], [0, 0, 1, 1], [], []>} : vector<32x64xbf16>, vector<64x128xbf16>, vector<32x128xf32> -> vector<32x128xf32>
    %16 = vector.shape_cast %15 : vector<32x128xf32> to vector<2x16x128xf32>
    %17 = arith.addf %11, %16 : vector<2x16x128xf32>
    %c0_12 = arith.constant 0 : index
    %c0_13 = arith.constant 0 : index
    %18 = vector.load %arg6[%c0_12, %c0_13] : memref<1x128xf32, #tpu.memory_space<vmem>>, vector<1x128xf32>
    %19 = vector.shape_cast %18 : vector<1x128xf32> to vector<1x1x128xf32>
    %20 = vector.broadcast %19 : vector<1x1x128xf32> to vector<2x16x128xf32>
    %21 = arith.addf %17, %20 : vector<2x16x128xf32>
    %c0_14 = arith.constant 0 : index
    %c0_15 = arith.constant 0 : index
    %c0_16 = arith.constant 0 : index
    %22 = vector.load %arg7[%c0_14, %c0_15, %c0_16] : memref<2x16x128xf32, #tpu.memory_space<vmem>>, vector<2x16x128xf32>
    tpu.vector_store %arg7[%c0_14, %c0_15, %c0_16], %21 {strides = array<i32>} : memref<2x16x128xf32, #tpu.memory_space<vmem>>, vector<2x16x128xf32>,
    return
  }
  func.func @transform_0(%arg0: i32) -> (i32, i32, i32) {
    %c0_i32 = arith.constant 0 : i32
    %c0_i32_0 = arith.constant 0 : i32
    %c0_i32_1 = arith.constant 0 : i32
    return %arg0, %c0_i32, %c0_i32_0 : i32, i32, i32
  }
  func.func @transform_1(%arg0: i32) -> (i32, i32) {
    %c0_i32 = arith.constant 0 : i32
    %c0_i32_0 = arith.constant 0 : i32
    %c0_i32_1 = arith.constant 0 : i32
    return %c0_i32, %c0_i32_0 : i32, i32
  }
  func.func @transform_2(%arg0: i32) -> (i32, i32) {
    %c0_i32 = arith.constant 0 : i32
    %c0_i32_0 = arith.constant 0 : i32
    %c0_i32_1 = arith.constant 0 : i32
    return %c0_i32, %c0_i32_0 : i32, i32
  }
  func.func @transform_3(%arg0: i32) -> (i32, i32, i32) {
    %c0_i32 = arith.constant 0 : i32
    %c0_i32_0 = arith.constant 0 : i32
    %c0_i32_1 = arith.constant 0 : i32
    return %arg0, %c0_i32, %c0_i32_0 : i32, i32, i32
  }
  func.func @transform_4(%arg0: i32) -> (i32, i32) {
    %c0_i32 = arith.constant 0 : i32
    %c0_i32_0 = arith.constant 0 : i32
    %c0_i32_1 = arith.constant 0 : i32
    return %c0_i32, %c0_i32_0 : i32, i32
  }
  func.func @transform_5(%arg0: i32) -> (i32, i32) {
    %c0_i32 = arith.constant 0 : i32
    %c0_i32_0 = arith.constant 0 : i32
    %c0_i32_1 = arith.constant 0 : i32
    return %c0_i32, %c0_i32_0 : i32, i32
  }
  func.func @transform_6(%arg0: i32) -> (i32, i32, i32) {
    %c0_i32 = arith.constant 0 : i32
    %c0_i32_0 = arith.constant 0 : i32
    %c0_i32_1 = arith.constant 0 : i32
    return %arg0, %c0_i32, %c0_i32_0 : i32, i32, i32
  }
}

module attributes {stable_mosaic.version = 11 : i64} {
  func.func @_conv3x3_kernel(%arg0: i32, %arg1: memref<2x16x128xbf16, #tpu.memory_space<vmem>>, %arg2: memref<2x1x128xf32, #tpu.memory_space<vmem>>, %arg3: memref<2x1x128xf32, #tpu.memory_space<vmem>>, %arg4: memref<3x128x128xbf16, #tpu.memory_space<vmem>>, %arg5: memref<1x128xf32, #tpu.memory_space<vmem>>, %arg6: memref<2x16x128xbf16, #tpu.memory_space<vmem>>, %arg7: memref<1x1x128xf32, #tpu.memory_space<vmem>>, %arg8: memref<1x1x128xf32, #tpu.memory_space<vmem>>) attributes {dimension_semantics = [#tpu.dimension_semantics<parallel>], iteration_bounds = array<i64: 1>, scalar_prefetch = 0 : i64, scratch_operands = 0 : i64, tpu.core_type = #tpu.core_type<tc>, window_params = [{transform_indices = @transform_0, window_bounds = array<i64: 2, 16, 128>}, {transform_indices = @transform_1, window_bounds = array<i64: 2, 1, 128>}, {transform_indices = @transform_2, window_bounds = array<i64: 2, 1, 128>}, {pipeline_mode = #tpu.pipeline_mode<synchronous>, transform_indices = @transform_3, window_bounds = array<i64: 3, 128, 128>}, {pipeline_mode = #tpu.pipeline_mode<synchronous>, transform_indices = @transform_4, window_bounds = array<i64: 1, 128>}, {transform_indices = @transform_5, window_bounds = array<i64: 2, 16, 128>}, {transform_indices = @transform_6, window_bounds = array<i64: 1, 1, 128>}, {transform_indices = @transform_7, window_bounds = array<i64: 1, 1, 128>}]} {
    %c0 = arith.constant 0 : index
    %c0_0 = arith.constant 0 : index
    %c0_1 = arith.constant 0 : index
    %0 = vector.load %arg1[%c0, %c0_0, %c0_1] : memref<2x16x128xbf16, #tpu.memory_space<vmem>>, vector<2x16x128xbf16>
    %1 = arith.extf %0 : vector<2x16x128xbf16> to vector<2x16x128xf32>
    %c0_2 = arith.constant 0 : index
    %c0_3 = arith.constant 0 : index
    %c0_4 = arith.constant 0 : index
    %2 = vector.load %arg2[%c0_2, %c0_3, %c0_4] : memref<2x1x128xf32, #tpu.memory_space<vmem>>, vector<2x1x128xf32>
    %3 = vector.broadcast %2 : vector<2x1x128xf32> to vector<2x16x128xf32>
    %4 = arith.mulf %1, %3 : vector<2x16x128xf32>
    %c0_5 = arith.constant 0 : index
    %c0_6 = arith.constant 0 : index
    %c0_7 = arith.constant 0 : index
    %5 = vector.load %arg3[%c0_5, %c0_6, %c0_7] : memref<2x1x128xf32, #tpu.memory_space<vmem>>, vector<2x1x128xf32>
    %6 = vector.broadcast %5 : vector<2x1x128xf32> to vector<2x16x128xf32>
    %7 = arith.addf %4, %6 : vector<2x16x128xf32>
    %cst = arith.constant 0.000000e+00 : f32
    %8 = vector.broadcast %cst : f32 to vector<2x16x128xf32>
    %9 = arith.maximumf %7, %8 : vector<2x16x128xf32>
    %10 = arith.truncf %9 : vector<2x16x128xf32> to vector<2x16x128xbf16>
    %11 = vector.shape_cast %10 : vector<2x16x128xbf16> to vector<32x128xbf16>
    %c1 = arith.constant 1 : index
    %c0_8 = arith.constant 0 : index
    %c0_9 = arith.constant 0 : index
    %12 = vector.load %arg4[%c1, %c0_8, %c0_9] : memref<3x128x128xbf16, #tpu.memory_space<vmem>>, vector<1x128x128xbf16>
    %13 = vector.shape_cast %12 : vector<1x128x128xbf16> to vector<128x128xbf16>
    %cst_10 = arith.constant dense<0.000000e+00> : vector<32x128xf32>
    %14 = tpu.matmul %11, %13, %cst_10 {dimension_numbers = #tpu.dot_dimension_numbers<[1], [0], [0], [1], [0, 0, 1, 1], [], []>} : vector<32x128xbf16>, vector<128x128xbf16>, vector<32x128xf32> -> vector<32x128xf32>
    %c0_11 = arith.constant 0 : index
    %c0_12 = arith.constant 0 : index
    %c0_13 = arith.constant 0 : index
    %15 = vector.load %arg4[%c0_11, %c0_12, %c0_13] : memref<3x128x128xbf16, #tpu.memory_space<vmem>>, vector<1x128x128xbf16>
    %16 = vector.shape_cast %15 : vector<1x128x128xbf16> to vector<128x128xbf16>
    %cst_14 = arith.constant dense<0.000000e+00> : vector<32x128xf32>
    %17 = tpu.matmul %11, %16, %cst_14 {dimension_numbers = #tpu.dot_dimension_numbers<[1], [0], [0], [1], [0, 0, 1, 1], [], []>} : vector<32x128xbf16>, vector<128x128xbf16>, vector<32x128xf32> -> vector<32x128xf32>
    %c2 = arith.constant 2 : index
    %c0_15 = arith.constant 0 : index
    %c0_16 = arith.constant 0 : index
    %18 = vector.load %arg4[%c2, %c0_15, %c0_16] : memref<3x128x128xbf16, #tpu.memory_space<vmem>>, vector<1x128x128xbf16>
    %19 = vector.shape_cast %18 : vector<1x128x128xbf16> to vector<128x128xbf16>
    %cst_17 = arith.constant dense<0.000000e+00> : vector<32x128xf32>
    %20 = tpu.matmul %11, %19, %cst_17 {dimension_numbers = #tpu.dot_dimension_numbers<[1], [0], [0], [1], [0, 0, 1, 1], [], []>} : vector<32x128xbf16>, vector<128x128xbf16>, vector<32x128xf32> -> vector<32x128xf32>
    %cst_18 = arith.constant 0.000000e+00 : f32
    %21 = vector.broadcast %cst_18 : f32 to vector<1x128xf32>
    %22 = vector.extract_strided_slice %17 {offsets = [0, 0], sizes = [31, 128], strides = [1, 1]} : vector<32x128xf32> to vector<31x128xf32>
    %23 = tpu.concatenate %21, %22 in 0 : vector<1x128xf32>, vector<31x128xf32> -> vector<32x128xf32>
    %24 = vector.extract_strided_slice %20 {offsets = [1, 0], sizes = [31, 128], strides = [1, 1]} : vector<32x128xf32> to vector<31x128xf32>
    %25 = tpu.concatenate %24, %21 in 0 : vector<31x128xf32>, vector<1x128xf32> -> vector<32x128xf32>
    %26 = tpu.iota {dimensions = array<i32: 0>} : vector<32x128xi32>
    %c16_i32 = arith.constant 16 : i32
    %c0_i32 = arith.constant 0 : i32
    %27 = arith.cmpi eq, %c16_i32, %c0_i32 : i32
    %c1_i32 = arith.constant 1 : i32
    %28 = arith.select %27, %c1_i32, %c16_i32 : i32
    %29 = vector.broadcast %28 : i32 to vector<32x128xi32>
    %30 = arith.remsi %26, %29 : vector<32x128xi32>
    %c0_i32_19 = arith.constant 0 : i32
    %31 = vector.broadcast %c0_i32_19 : i32 to vector<32x128xi32>
    %32 = arith.cmpi ne, %30, %31 : vector<32x128xi32>
    %c0_i32_20 = arith.constant 0 : i32
    %33 = vector.broadcast %c0_i32_20 : i32 to vector<32x128xi32>
    %34 = arith.cmpi slt, %30, %33 : vector<32x128xi32>
    %c0_i32_21 = arith.constant 0 : i32
    %35 = arith.cmpi slt, %28, %c0_i32_21 : i32
    %36 = vector.broadcast %35 : i1 to vector<32x128xi1>
    %37 = vector.broadcast %36 : vector<32x128xi1> to vector<32x128xi1>
    %38 = arith.xori %34, %37 : vector<32x128xi1>
    %39 = arith.andi %38, %32 : vector<32x128xi1>
    %40 = vector.broadcast %28 : i32 to vector<32x128xi32>
    %41 = arith.addi %30, %40 : vector<32x128xi32>
    %42 = arith.select %39, %41, %30 : vector<32x128xi1>, vector<32x128xi32>
    %c0_i32_22 = arith.constant 0 : i32
    %43 = vector.broadcast %c0_i32_22 : i32 to vector<32x128xi32>
    %44 = arith.cmpi ne, %42, %43 : vector<32x128xi32>
    %cst_23 = arith.constant 0.000000e+00 : f32
    %45 = vector.broadcast %cst_23 : f32 to vector<32x128xf32>
    %46 = arith.select %44, %23, %45 : vector<32x128xi1>, vector<32x128xf32>
    %c15_i32 = arith.constant 15 : i32
    %47 = vector.broadcast %c15_i32 : i32 to vector<32x128xi32>
    %48 = arith.cmpi ne, %42, %47 : vector<32x128xi32>
    %cst_24 = arith.constant 0.000000e+00 : f32
    %49 = vector.broadcast %cst_24 : f32 to vector<32x128xf32>
    %50 = arith.select %48, %25, %49 : vector<32x128xi1>, vector<32x128xf32>
    %51 = arith.addf %14, %46 : vector<32x128xf32>
    %52 = arith.addf %51, %50 : vector<32x128xf32>
    %c0_25 = arith.constant 0 : index
    %c0_26 = arith.constant 0 : index
    %53 = vector.load %arg5[%c0_25, %c0_26] : memref<1x128xf32, #tpu.memory_space<vmem>>, vector<1x128xf32>
    %54 = vector.broadcast %53 : vector<1x128xf32> to vector<32x128xf32>
    %55 = arith.addf %52, %54 : vector<32x128xf32>
    %56 = vector.shape_cast %55 : vector<32x128xf32> to vector<2x16x128xf32>
    %57 = arith.truncf %56 : vector<2x16x128xf32> to vector<2x16x128xbf16>
    %c0_27 = arith.constant 0 : index
    %c0_28 = arith.constant 0 : index
    %c0_29 = arith.constant 0 : index
    %58 = vector.load %arg6[%c0_27, %c0_28, %c0_29] : memref<2x16x128xbf16, #tpu.memory_space<vmem>>, vector<2x16x128xbf16>
    tpu.vector_store %arg6[%c0_27, %c0_28, %c0_29], %57 {strides = array<i32>} : memref<2x16x128xbf16, #tpu.memory_space<vmem>>, vector<2x16x128xbf16>,
    %cst_30 = arith.constant dense<0.000000e+00> : vector<128xf32>
    %59 = vector.multi_reduction <add>, %55, %cst_30 [0] : vector<32x128xf32> to vector<128xf32>
    %60 = vector.shape_cast %59 : vector<128xf32> to vector<1x128xf32>
    %61 = vector.shape_cast %60 : vector<1x128xf32> to vector<1x1x128xf32>
    %c0_31 = arith.constant 0 : index
    %c0_32 = arith.constant 0 : index
    %c0_33 = arith.constant 0 : index
    %62 = vector.load %arg7[%c0_31, %c0_32, %c0_33] : memref<1x1x128xf32, #tpu.memory_space<vmem>>, vector<1x1x128xf32>
    tpu.vector_store %arg7[%c0_31, %c0_32, %c0_33], %61 {strides = array<i32>} : memref<1x1x128xf32, #tpu.memory_space<vmem>>, vector<1x1x128xf32>,
    %63 = arith.mulf %55, %55 : vector<32x128xf32>
    %cst_34 = arith.constant dense<0.000000e+00> : vector<128xf32>
    %64 = vector.multi_reduction <add>, %63, %cst_34 [0] : vector<32x128xf32> to vector<128xf32>
    %65 = vector.shape_cast %64 : vector<128xf32> to vector<1x128xf32>
    %66 = vector.shape_cast %65 : vector<1x128xf32> to vector<1x1x128xf32>
    %c0_35 = arith.constant 0 : index
    %c0_36 = arith.constant 0 : index
    %c0_37 = arith.constant 0 : index
    %67 = vector.load %arg8[%c0_35, %c0_36, %c0_37] : memref<1x1x128xf32, #tpu.memory_space<vmem>>, vector<1x1x128xf32>
    tpu.vector_store %arg8[%c0_35, %c0_36, %c0_37], %66 {strides = array<i32>} : memref<1x1x128xf32, #tpu.memory_space<vmem>>, vector<1x1x128xf32>,
    return
  }
  func.func @transform_0(%arg0: i32) -> (i32, i32, i32) {
    %c0_i32 = arith.constant 0 : i32
    %c0_i32_0 = arith.constant 0 : i32
    %c0_i32_1 = arith.constant 0 : i32
    return %arg0, %c0_i32, %c0_i32_0 : i32, i32, i32
  }
  func.func @transform_1(%arg0: i32) -> (i32, i32, i32) {
    %c0_i32 = arith.constant 0 : i32
    %c0_i32_0 = arith.constant 0 : i32
    %c0_i32_1 = arith.constant 0 : i32
    return %arg0, %c0_i32, %c0_i32_0 : i32, i32, i32
  }
  func.func @transform_2(%arg0: i32) -> (i32, i32, i32) {
    %c0_i32 = arith.constant 0 : i32
    %c0_i32_0 = arith.constant 0 : i32
    %c0_i32_1 = arith.constant 0 : i32
    return %arg0, %c0_i32, %c0_i32_0 : i32, i32, i32
  }
  func.func @transform_3(%arg0: i32) -> (i32, i32, i32) {
    %c0_i32 = arith.constant 0 : i32
    %c0_i32_0 = arith.constant 0 : i32
    %c0_i32_1 = arith.constant 0 : i32
    %c0_i32_2 = arith.constant 0 : i32
    return %c0_i32, %c0_i32_0, %c0_i32_1 : i32, i32, i32
  }
  func.func @transform_4(%arg0: i32) -> (i32, i32) {
    %c0_i32 = arith.constant 0 : i32
    %c0_i32_0 = arith.constant 0 : i32
    %c0_i32_1 = arith.constant 0 : i32
    return %c0_i32, %c0_i32_0 : i32, i32
  }
  func.func @transform_5(%arg0: i32) -> (i32, i32, i32) {
    %c0_i32 = arith.constant 0 : i32
    %c0_i32_0 = arith.constant 0 : i32
    %c0_i32_1 = arith.constant 0 : i32
    return %arg0, %c0_i32, %c0_i32_0 : i32, i32, i32
  }
  func.func @transform_6(%arg0: i32) -> (i32, i32, i32) {
    %c0_i32 = arith.constant 0 : i32
    %c0_i32_0 = arith.constant 0 : i32
    %c0_i32_1 = arith.constant 0 : i32
    return %arg0, %c0_i32, %c0_i32_0 : i32, i32, i32
  }
  func.func @transform_7(%arg0: i32) -> (i32, i32, i32) {
    %c0_i32 = arith.constant 0 : i32
    %c0_i32_0 = arith.constant 0 : i32
    %c0_i32_1 = arith.constant 0 : i32
    return %arg0, %c0_i32, %c0_i32_0 : i32, i32, i32
  }
}

</mosaic_0001>

<llo_original>
// kernel: unet_conv_block.5
$region0: #{unet_conv_block.5}
  #allocation0 [shape = 'u32[]', space=smem, size = 0x4, offset = 0x4, fixed_abs, tag = 'smem constant byte address 0x4 - core index']
  #allocation1 [shape = 'u32[72,128]{1,0:T(1,128)}', space=vmem, size = 0x9000, scoped, tag = 'internal scratch']
  %s0 = inlined_call_operand.vmem [shape: bf16[2,16,128], index: 0, kind: input, shape index: {}]
  %s1 = inlined_call_operand.vmem [shape: f32[1,128], index: 1, kind: input, shape index: {}]
  %s2 = inlined_call_operand.vmem [shape: f32[1,128], index: 2, kind: input, shape index: {}]
  %s3 = inlined_call_operand.vmem [shape: bf16[2,16,64], index: 3, kind: input, shape index: {}]
  %s4 = inlined_call_operand.vmem [shape: bf16[64,128], index: 4, kind: input, shape index: {}]
  %s5 = inlined_call_operand.vmem [shape: f32[1,128], index: 5, kind: input, shape index: {}]
  %s6 = inlined_call_operand.vmem [shape: f32[2,16,128], index: 6, kind: output, shape index: {}]
  %s7 = sld [smem:[#allocation0]]
  $region34: #{unet_conv_block.5} parent=0
    _
  %s9 = ssub.s32 1, %s7
  %s10 = scalar_select 0, %s9, %s7
  // Predicated region
  $region2: #{unet_conv_block.5} parent=0 // pred_check
    _
  $region3: #{unet_conv_block.5} parent=0 // pred_check_branch
    %12 = sbr.rel (0) target = $region5
  $region4: #{unet_conv_block.5} parent=0 // pred_region
    _
  $region5: #{unet_conv_block.5} parent=0 // pred_fallthru
    _
  // Predicated region
  $region6: #{unet_conv_block.5} parent=0 // pred_check
    _
  $region7: #{unet_conv_block.5} parent=0 // pred_check_branch
    %14 = sbr.rel (0) target = $region9
  $region8: #{unet_conv_block.5} parent=0 // pred_region
    _
  $region9: #{unet_conv_block.5} parent=0 // pred_fallthru
    _
  // Predicated region
  $region10: #{unet_conv_block.5} parent=0 // pred_check
    _
  $region11: #{unet_conv_block.5} parent=0 // pred_check_branch
    %16 = sbr.rel (0) target = $region13
  $region12: #{unet_conv_block.5} parent=0 // pred_region
    _
  $region13: #{unet_conv_block.5} parent=0 // pred_fallthru
    _
  // Predicated region
  $region14: #{unet_conv_block.5} parent=0 // pred_check
    _
  $region15: #{unet_conv_block.5} parent=0 // pred_check_branch
    %18 = sbr.rel (0) target = $region17
  $region16: #{unet_conv_block.5} parent=0 // pred_region
    _
  $region17: #{unet_conv_block.5} parent=0 // pred_fallthru
    _
  // Predicated region
  $region18: #{unet_conv_block.5} parent=0 // pred_check
    _
  $region19: #{unet_conv_block.5} parent=0 // pred_check_branch
    %20 = sbr.rel (0) target = $region21
  $region20: #{unet_conv_block.5} parent=0 // pred_region
    _
  $region21: #{unet_conv_block.5} parent=0 // pred_fallthru
    _
  // Predicated region
  $region22: #{unet_conv_block.5} parent=0 // pred_check
    _
  $region23: #{unet_conv_block.5} parent=0 // pred_check_branch
    %22 = sbr.rel (0) target = $region25
  $region24: #{unet_conv_block.5} parent=0 // pred_region
    _
  $region25: #{unet_conv_block.5} parent=0 // pred_fallthru
    _
  %v24 = vld [vmem:[%s0] sm:$0xf]
  %v25 = vld [vmem:[%s0 + $0x4] sm:$0xf]
  %v26 = vld [vmem:[%s0 + $0x8] sm:$0xf]
  %v27 = vld [vmem:[%s0 + $0xc] sm:$0xf]
  %v28 = vunpack.c.l.bf16 %v24
  %v29 = vunpack.c.l.bf16 %v25
  %v30 = vunpack.c.l.bf16 %v26
  %v31 = vunpack.c.l.bf16 %v27
  %v32 = vld [vmem:[%s1] sm:$0x1]
  %v34 = vperm.slane %v32, 0
  %v36 = vmul.f32 %v28, %v34
  %v37 = vmul.f32 %v29, %v34
  %v38 = vmul.f32 %v30, %v34
  %v39 = vmul.f32 %v31, %v34
  %v40 = vld [vmem:[%s2] sm:$0x1]
  %v42 = vperm.slane %v40, 0
  %v44 = vadd.f32 %v36, %v42
  %v45 = vadd.f32 %v37, %v42
  %v46 = vadd.f32 %v38, %v42
  %v47 = vadd.f32 %v39, %v42
  %v48 = vmax.f32 %v44, 0.0
  %v49 = vmax.f32 %v45, 0.0
  %v50 = vmax.f32 %v46, 0.0
  %v51 = vmax.f32 %v47, 0.0
  %v52 = vld [vmem:[%s3] sm:$0xf]
  %v53 = vld [vmem:[%s3 + $0x4] sm:$0xf]
  %v54 = vld [vmem:[%s3 + $0x8] sm:$0xf]
  %v55 = vld [vmem:[%s3 + $0xc] sm:$0xf]
  %v56 = vld [vmem:[%s4] sm:$0xf]
  %v57 = vld [vmem:[%s4 + $0x4] sm:$0xf]
  %v58 = vld [vmem:[%s4 + $0x8] sm:$0xf]
  %v59 = vld [vmem:[%s4 + $0xc] sm:$0xf]
  %v60 = vld [vmem:[%s4 + $0x10] sm:$0xf]
  %v61 = vld [vmem:[%s4 + $0x14] sm:$0xf]
  %v62 = vld [vmem:[%s4 + $0x18] sm:$0xf]
  %v63 = vld [vmem:[%s4 + $0x1c] sm:$0xf]
  %v68 = vunpack.c.l.b16 %v52
  %v69 = vunpack.c.l.b16 %v53
  %v70 = vunpack.c.l.b16 %v54
  %v71 = vunpack.c.l.b16 %v55
  %v72 = vpack.c.b16 %v69, %v68
  %v73 = vpack.c.b16 %v71, %v70
  %v82 = vunpack.c.l.b16 %v56
  %v83 = vunpack.c.l.b16 %v57
  %v84 = vunpack.c.l.b16 %v58
  %v85 = vunpack.c.l.b16 %v59
  %v86 = vunpack.c.l.b16 %v60
  %v87 = vunpack.c.l.b16 %v61
  %v88 = vunpack.c.l.b16 %v62
  %v89 = vunpack.c.l.b16 %v63
  %v90 = vpack.c.b16 %v83, %v82
  %v91 = vpack.c.b16 %v85, %v84
  %v92 = vpack.c.b16 %v87, %v86
  %v93 = vpack.c.b16 %v89, %v88
  %vm98 = vcmask 523264
  %v100 = vsel %vm98, %v72, 0
  %v103 = vsel %vm98, %v73, 0
  %105 = vmatpush.bf16.msra.mxu0 0
  %106 = vmatpush.bf16.msra.mxu0 0
  %107 = vmatpush.bf16.msra.mxu0 0
  %108 = vmatpush.bf16.msra.mxu0 0
  %109 = vmatpush.bf16.msra.mxu0 %v93
  %110 = vmatpush.bf16.msra.mxu0 %v92
  %111 = vmatpush.bf16.msra.mxu0 %v91
  %112 = vmatpush.bf16.msra.mxu0 %v90
  %113 = vmatmul.bf16.gmra.mxu0 %v100
  %v114 = vpop.f32.mrf.mxu0
  %v115 = vadd.f32 0.0, %v114
  %v116 = vpop.f32.mrf.mxu0
  %v117 = vadd.f32 0.0, %v116
  %118 = vmatmul.bf16.gmra.mxu0 %v103
  %v119 = vpop.f32.mrf.mxu0
  %v120 = vadd.f32 0.0, %v119
  %v121 = vpop.f32.mrf.mxu0
  %v122 = vadd.f32 0.0, %v121
  %123 = vdwg.mxu0
  %v124 = vadd.f32 %v48, %v115
  %v125 = vadd.f32 %v49, %v117
  %v126 = vadd.f32 %v50, %v120
  %v127 = vadd.f32 %v51, %v122
  %v128 = vld [vmem:[%s5] sm:$0x1]
  %v130 = vperm.slane %v128, 0
  %v132 = vadd.f32 %v124, %v130
  %v133 = vadd.f32 %v125, %v130
  %v134 = vadd.f32 %v126, %v130
  %v135 = vadd.f32 %v127, %v130
  %136 = vst [vmem:[%s6] sm:$0xff] %v132
  %137 = vst [vmem:[%s6 + $0x8] sm:$0xff] %v133
  %138 = vst [vmem:[%s6 + $0x10] sm:$0xff] %v134
  %139 = vst [vmem:[%s6 + $0x18] sm:$0xff] %v135
  // Predicated region
  $region26: #{unet_conv_block.5} parent=0 // pred_check
    _
  $region27: #{unet_conv_block.5} parent=0 // pred_check_branch
    %141 = sbr.rel (0) target = $region29
  $region28: #{unet_conv_block.5} parent=0 // pred_region
    _
  $region29: #{unet_conv_block.5} parent=0 // pred_fallthru
    _
  // Predicated region
  $region30: #{unet_conv_block.5} parent=0 // pred_check
    _
  $region31: #{unet_conv_block.5} parent=0 // pred_check_branch
    %143 = sbr.rel (0) target = $region33
  $region32: #{unet_conv_block.5} parent=0 // pred_region
    _
  $region33: #{unet_conv_block.5} parent=0 // pred_fallthru
    _

// kernel: unet_conv_block.3
$region0: #{unet_conv_block.3}
  #allocation0 [shape = 'u32[]', space=smem, size = 0x4, offset = 0x4, fixed_abs, tag = 'smem constant byte address 0x4 - core index']
  #allocation1 [shape = 'u32[72,128]{1,0:T(1,128)}', space=vmem, size = 0x9000, scoped, tag = 'internal scratch']
  %s0 = inlined_call_operand.vmem [shape: bf16[2,16,64], index: 0, kind: input, shape index: {}]
  %s1 = inlined_call_operand.vmem [shape: bf16[3,64,128], index: 1, kind: input, shape index: {}]
  %s2 = inlined_call_operand.vmem [shape: f32[1,128], index: 2, kind: input, shape index: {}]
  %s3 = inlined_call_operand.vmem [shape: bf16[2,16,128], index: 3, kind: output, shape index: {0}]
  %s4 = inlined_call_operand.vmem [shape: f32[1,1,128], index: 4, kind: output, shape index: {1}]
  %s5 = inlined_call_operand.vmem [shape: f32[1,1,128], index: 5, kind: output, shape index: {2}]
  %6 = xla_tuple %s3, %s4, %s5
  %s7 = sld [smem:[#allocation0]]
  $region38: #{unet_conv_block.3} parent=0
    _
  %s9 = ssub.s32 1, %s7
  %s10 = scalar_select 0, %s9, %s7
  // Predicated region
  $region2: #{unet_conv_block.3} parent=0 // pred_check
    _
  $region3: #{unet_conv_block.3} parent=0 // pred_check_branch
    %12 = sbr.rel (0) target = $region5
  $region4: #{unet_conv_block.3} parent=0 // pred_region
    _
  $region5: #{unet_conv_block.3} parent=0 // pred_fallthru
    _
  // Predicated region
  $region6: #{unet_conv_block.3} parent=0 // pred_check
    _
  $region7: #{unet_conv_block.3} parent=0 // pred_check_branch
    %14 = sbr.rel (0) target = $region9
  $region8: #{unet_conv_block.3} parent=0 // pred_region
    _
  $region9: #{unet_conv_block.3} parent=0 // pred_fallthru
    _
  // Predicated region
  $region10: #{unet_conv_block.3} parent=0 // pred_check
    _
  $region11: #{unet_conv_block.3} parent=0 // pred_check_branch
    %16 = sbr.rel (0) target = $region13
  $region12: #{unet_conv_block.3} parent=0 // pred_region
    _
  $region13: #{unet_conv_block.3} parent=0 // pred_fallthru
    _
  %v18 = vld [vmem:[%s0] sm:$0xf]
  %v19 = vld [vmem:[%s0 + $0x4] sm:$0xf]
  %v20 = vld [vmem:[%s0 + $0x8] sm:$0xf]
  %v21 = vld [vmem:[%s0 + $0xc] sm:$0xf]
  %s22 = scalar_lea.vmem %s1, 32
  %v23 = vld [vmem:[%s22] sm:$0xf]
  %v24 = vld [vmem:[%s22 + $0x4] sm:$0xf]
  %v25 = vld [vmem:[%s22 + $0x8] sm:$0xf]
  %v26 = vld [vmem:[%s22 + $0xc] sm:$0xf]
  %v27 = vld [vmem:[%s22 + $0x10] sm:$0xf]
  %v28 = vld [vmem:[%s22 + $0x14] sm:$0xf]
  %v29 = vld [vmem:[%s22 + $0x18] sm:$0xf]
  %v30 = vld [vmem:[%s22 + $0x1c] sm:$0xf]
  %v31 = vld [vmem:[%s1] sm:$0xf]
  %v32 = vld [vmem:[%s1 + $0x4] sm:$0xf]
  %v33 = vld [vmem:[%s1 + $0x8] sm:$0xf]
  %v34 = vld [vmem:[%s1 + $0xc] sm:$0xf]
  %v35 = vld [vmem:[%s1 + $0x10] sm:$0xf]
  %v36 = vld [vmem:[%s1 + $0x14] sm:$0xf]
  %v37 = vld [vmem:[%s1 + $0x18] sm:$0xf]
  %v38 = vld [vmem:[%s1 + $0x1c] sm:$0xf]
  %v43 = vunpack.c.l.b16 %v18
  %v44 = vunpack.c.l.b16 %v19
  %v45 = vunpack.c.l.b16 %v20
  %v46 = vunpack.c.l.b16 %v21
  %v47 = vpack.c.b16 %v44, %v43
  %v48 = vpack.c.b16 %v46, %v45
  %v57 = vunpack.c.l.b16 %v31
  %v58 = vunpack.c.l.b16 %v32
  %v59 = vunpack.c.l.b16 %v33
  %v60 = vunpack.c.l.b16 %v34
  %v61 = vunpack.c.l.b16 %v35
  %v62 = vunpack.c.l.b16 %v36
  %v63 = vunpack.c.l.b16 %v37
  %v64 = vunpack.c.l.b16 %v38
  %v65 = vpack.c.b16 %v58, %v57
  %v66 = vpack.c.b16 %v60, %v59
  %v67 = vpack.c.b16 %v62, %v61
  %v68 = vpack.c.b16 %v64, %v63
  %vm73 = vcmask 523264
  %v75 = vsel %vm73, %v47, 0
  %v78 = vsel %vm73, %v48, 0
  %80 = vmatpush.bf16.msra.mxu0 0
  %81 = vmatpush.bf16.msra.mxu0 0
  %82 = vmatpush.bf16.msra.mxu0 0
  %83 = vmatpush.bf16.msra.mxu0 0
  %84 = vmatpush.bf16.msra.mxu0 %v68
  %85 = vmatpush.bf16.msra.mxu0 %v67
  %86 = vmatpush.bf16.msra.mxu0 %v66
  %87 = vmatpush.bf16.msra.mxu0 %v65
  %88 = vmatmul.bf16.gmra.mxu0 %v75
  %v89 = vpop.f32.mrf.mxu0
  %v90 = vadd.f32 0.0, %v89
  %v91 = vpop.f32.mrf.mxu0
  %v92 = vadd.f32 0.0, %v91
  %93 = vmatmul.bf16.gmra.mxu0 %v78
  %v94 = vpop.f32.mrf.mxu0
  %v95 = vadd.f32 0.0, %v94
  %v96 = vpop.f32.mrf.mxu0
  %v97 = vadd.f32 0.0, %v96
  %98 = vdwg.mxu0
  %s99 = scalar_lea.vmem %s1, 64
  %v100 = vld [vmem:[%s99] sm:$0xf]
  %v101 = vld [vmem:[%s99 + $0x4] sm:$0xf]
  %v102 = vld [vmem:[%s99 + $0x8] sm:$0xf]
  %v103 = vld [vmem:[%s99 + $0xc] sm:$0xf]
  %v104 = vld [vmem:[%s99 + $0x10] sm:$0xf]
  %v105 = vld [vmem:[%s99 + $0x14] sm:$0xf]
  %v106 = vld [vmem:[%s99 + $0x18] sm:$0xf]
  %v107 = vld [vmem:[%s99 + $0x1c] sm:$0xf]
  %v116 = vunpack.c.l.b16 %v100
  %v117 = vunpack.c.l.b16 %v101
  %v118 = vunpack.c.l.b16 %v102
  %v119 = vunpack.c.l.b16 %v103
  %v120 = vunpack.c.l.b16 %v104
  %v121 = vunpack.c.l.b16 %v105
  %v122 = vunpack.c.l.b16 %v106
  %v123 = vunpack.c.l.b16 %v107
  %v124 = vpack.c.b16 %v117, %v116
  %v125 = vpack.c.b16 %v119, %v118
  %v126 = vpack.c.b16 %v121, %v120
  %v127 = vpack.c.b16 %v123, %v122
  %132 = vmatpush.bf16.msra.mxu0 0
  %133 = vmatpush.bf16.msra.mxu0 0
  %134 = vmatpush.bf16.msra.mxu0 0
  %135 = vmatpush.bf16.msra.mxu0 0
  %136 = vmatpush.bf16.msra.mxu0 %v127
  %137 = vmatpush.bf16.msra.mxu0 %v126
  %138 = vmatpush.bf16.msra.mxu0 %v125
  %139 = vmatpush.bf16.msra.mxu0 %v124
  %140 = vmatmul.bf16.gmra.mxu0 %v75
  %v141 = vpop.f32.mrf.mxu0
  %v142 = vadd.f32 0.0, %v141
  %v143 = vpop.f32.mrf.mxu0
  %v144 = vadd.f32 0.0, %v143
  %145 = vmatmul.bf16.gmra.mxu0 %v78
  %v146 = vpop.f32.mrf.mxu0
  %v147 = vadd.f32 0.0, %v146
  %v148 = vpop.f32.mrf.mxu0
  %v149 = vadd.f32 0.0, %v148
  %150 = vdwg.mxu0
  %vm155 = vcmask 1040384
  %v156 = vrot.slane %v90, 7
  %v157 = vrot.slane %v92, 7
  %v158 = vsel %vm155, %v156, %v157
  %v159 = vrot.slane %v95, 7
  %v160 = vsel %vm155, %v157, %v159
  %v161 = vrot.slane %v97, 7
  %v162 = vsel %vm155, %v159, %v161
  %v167 = vsel %vm155, 0.0, %v156
  %vm172 = vcmask 1046528
  %v173 = vrot.slane %v142, 1
  %v174 = vrot.slane %v144, 1
  %v175 = vsel %vm172, %v173, %v174
  %v176 = vrot.slane %v147, 1
  %v177 = vsel %vm172, %v174, %v176
  %v178 = vrot.slane %v149, 1
  %v179 = vsel %vm172, %v176, %v178
  %v184 = vsel %vm172, %v178, 0.0
  %v185 = vlaneseq
  %v186 = vshrl.u32 %v185, 7
  %v187 = vadd.s32 %v186, 8
  %v188 = vadd.s32 %v186, 16
  %v189 = vadd.s32 %v186, 24
  %vm190 = vcmp.lt.s32.totalorder %v186, 0
  %v191 = vsub.s32 0, %v186
  %v192 = vsel %vm190, %v191, %v186
  %v193 = vshrl.u32 %v192, 4
  %v194 = vand.u32 %v192, 15
  %v195 = vsub.s32 0, %v194
  %v196 = vsel %vm190, %v195, %v194
  %vm197 = vcmp.lt.s32.totalorder %v187, 0
  %v198 = vsub.s32 0, %v187
  %v199 = vsel %vm197, %v198, %v187
  %v200 = vshrl.u32 %v199, 4
  %v201 = vand.u32 %v199, 15
  %v202 = vsub.s32 0, %v201
  %v203 = vsel %vm197, %v202, %v201
  %vm204 = vcmp.lt.s32.totalorder %v188, 0
  %v205 = vsub.s32 0, %v188
  %v206 = vsel %vm204, %v205, %v188
  %v207 = vshrl.u32 %v206, 4
  %v208 = vand.u32 %v206, 15
  %v209 = vsub.s32 0, %v208
  %v210 = vsel %vm204, %v209, %v208
  %vm211 = vcmp.lt.s32.totalorder %v189, 0
  %v212 = vsub.s32 0, %v189
  %v213 = vsel %vm211, %v212, %v189
  %v214 = vshrl.u32 %v213, 4
  %v215 = vand.u32 %v213, 15
  %v216 = vsub.s32 0, %v215
  %v217 = vsel %vm211, %v216, %v215
  %vm218 = vcmp.ne.s32.totalorder %v196, 0
  %vm219 = vcmp.ne.s32.totalorder %v203, 0
  %vm220 = vcmp.ne.s32.totalorder %v210, 0
  %vm221 = vcmp.ne.s32.totalorder %v217, 0
  %vm222 = vcmp.lt.s32.totalorder %v196, 0
  %vm223 = vcmp.lt.s32.totalorder %v203, 0
  %vm224 = vcmp.lt.s32.totalorder %v210, 0
  %vm225 = vcmp.lt.s32.totalorder %v217, 0
  %vm226 = vmand %vm222, %vm218
  %vm227 = vmand %vm223, %vm219
  %vm228 = vmand %vm224, %vm220
  %vm229 = vmand %vm225, %vm221
  %v230 = vadd.s32 %v196, 16
  %v231 = vadd.s32 %v203, 16
  %v232 = vadd.s32 %v210, 16
  %v233 = vadd.s32 %v217, 16
  %v234 = vsel %vm226, %v230, %v196
  %v235 = vsel %vm227, %v231, %v203
  %v236 = vsel %vm228, %v232, %v210
  %v237 = vsel %vm229, %v233, %v217
  %vm238 = vcmp.ne.s32.totalorder %v234, 0
  %vm239 = vcmp.ne.s32.totalorder %v235, 0
  %vm240 = vcmp.ne.s32.totalorder %v236, 0
  %vm241 = vcmp.ne.s32.totalorder %v237, 0
  %v242 = vsel %vm238, %v167, 0.0
  %v243 = vsel %vm239, %v158, 0.0
  %v244 = vsel %vm240, %v160, 0.0
  %v245 = vsel %vm241, %v162, 0.0
  %vm246 = vcmp.ne.s32.totalorder %v234, 15
  %vm247 = vcmp.ne.s32.totalorder %v235, 15
  %vm248 = vcmp.ne.s32.totalorder %v236, 15
  %vm249 = vcmp.ne.s32.totalorder %v237, 15
  %v250 = vsel %vm246, %v175, 0.0
  %v251 = vsel %vm247, %v177, 0.0
  %v252 = vsel %vm248, %v179, 0.0
  %v253 = vsel %vm249, %v184, 0.0
  %v262 = vunpack.c.l.b16 %v23
  %v263 = vunpack.c.l.b16 %v24
  %v264 = vunpack.c.l.b16 %v25
  %v265 = vunpack.c.l.b16 %v26
  %v266 = vunpack.c.l.b16 %v27
  %v267 = vunpack.c.l.b16 %v28
  %v268 = vunpack.c.l.b16 %v29
  %v269 = vunpack.c.l.b16 %v30
  %v270 = vpack.c.b16 %v263, %v262
  %v271 = vpack.c.b16 %v265, %v264
  %v272 = vpack.c.b16 %v267, %v266
  %v273 = vpack.c.b16 %v269, %v268
  %278 = vmatpush.bf16.msra.mxu0 0
  %279 = vmatpush.bf16.msra.mxu0 0
  %280 = vmatpush.bf16.msra.mxu0 0
  %281 = vmatpush.bf16.msra.mxu0 0
  %282 = vmatpush.bf16.msra.mxu0 %v273
  %283 = vmatpush.bf16.msra.mxu0 %v272
  %284 = vmatpush.bf16.msra.mxu0 %v271
  %285 = vmatpush.bf16.msra.mxu0 %v270
  %286 = vmatmul.bf16.gmra.mxu0 %v75
  %v287 = vpop.f32.mrf.mxu0
  %v288 = vadd.f32 %v242, %v287
  %v289 = vpop.f32.mrf.mxu0
  %v290 = vadd.f32 %v243, %v289
  %291 = vmatmul.bf16.gmra.mxu0 %v78
  %v292 = vpop.f32.mrf.mxu0
  %v293 = vadd.f32 %v244, %v292
  %v294 = vpop.f32.mrf.mxu0
  %v295 = vadd.f32 %v245, %v294
  %296 = vdwg.mxu0
  %v297 = vadd.f32 %v288, %v250
  %v298 = vadd.f32 %v290, %v251
  %v299 = vadd.f32 %v293, %v252
  %v300 = vadd.f32 %v295, %v253
  %v301 = vld [vmem:[%s2] sm:$0x1]
  %v303 = vperm.slane %v301, 0
  %v305 = vadd.f32 %v297, %v303
  %v306 = vadd.f32 %v298, %v303
  %v307 = vadd.f32 %v299, %v303
  %v308 = vadd.f32 %v300, %v303
  %v309 = vpack.c.bf16 %v305, %v305
  %v310 = vpack.c.bf16 %v306, %v306
  %v311 = vpack.c.bf16 %v307, %v307
  %v312 = vpack.c.bf16 %v308, %v308
  %313 = vst [vmem:[%s3] sm:$0xf] %v309
  %314 = vst [vmem:[%s3 + $0x4] sm:$0xf] %v310
  %315 = vst [vmem:[%s3 + $0x8] sm:$0xf] %v311
  %316 = vst [vmem:[%s3 + $0xc] sm:$0xf] %v312
  %v317 = vadd.f32 %v305, %v306
  %v318 = vadd.f32 %v317, %v307
  %v319 = vadd.f32 %v318, %v308
  %v320 = vrot.slane %v319, 4
  %v321 = vadd.f32 %v319, %v320
  %v322 = vrot.slane %v321, 2
  %v323 = vadd.f32 %v321, %v322
  %v324 = vrot.slane %v323, 1
  %v325 = vadd.f32 %v323, %v324
  %326 = vst [vmem:[%s4] sm:$0x1] %v325
  %v327 = vmul.f32 %v305, %v305
  %v328 = vmul.f32 %v306, %v306
  %v329 = vmul.f32 %v307, %v307
  %v330 = vmul.f32 %v308, %v308
  %v331 = vadd.f32 %v327, %v328
  %v332 = vadd.f32 %v331, %v329
  %v333 = vadd.f32 %v332, %v330
  %v334 = vrot.slane %v333, 4
  %v335 = vadd.f32 %v333, %v334
  %v336 = vrot.slane %v335, 2
  %v337 = vadd.f32 %v335, %v336
  %v338 = vrot.slane %v337, 1
  %v339 = vadd.f32 %v337, %v338
  %340 = vst [vmem:[%s5] sm:$0x1] %v339
  // Predicated region
  $region14: #{unet_conv_block.3} parent=0 // pred_check
    _
  $region15: #{unet_conv_block.3} parent=0 // pred_check_branch
    %342 = sbr.rel (0) target = $region17
  $region16: #{unet_conv_block.3} parent=0 // pred_region
    _
  $region17: #{unet_conv_block.3} parent=0 // pred_fallthru
    _
  // Predicated region
  $region18: #{unet_conv_block.3} parent=0 // pred_check
    _
  $region19: #{unet_conv_block.3} parent=0 // pred_check_branch
    %344 = sbr.rel (0) target = $region21
  $region20: #{unet_conv_block.3} parent=0 // pred_region
    _
  $region21: #{unet_conv_block.3} parent=0 // pred_fallthru
    _
  // Predicated region
  $region22: #{unet_conv_block.3} parent=0 // pred_check
    _
  $region23: #{unet_conv_block.3} parent=0 // pred_check_branch
    %346 = sbr.rel (0) target = $region25
  $region24: #{unet_conv_block.3} parent=0 // pred_region
    _
  $region25: #{unet_conv_block.3} parent=0 // pred_fallthru
    _
  // Predicated region
  $region26: #{unet_conv_block.3} parent=0 // pred_check
    _
  $region27: #{unet_conv_block.3} parent=0 // pred_check_branch
    %348 = sbr.rel (0) target = $region29
  $region28: #{unet_conv_block.3} parent=0 // pred_region
    _
  $region29: #{unet_conv_block.3} parent=0 // pred_fallthru
    _
  // Predicated region
  $region30: #{unet_conv_block.3} parent=0 // pred_check
    _
  $region31: #{unet_conv_block.3} parent=0 // pred_check_branch
    %350 = sbr.rel (0) target = $region33
  $region32: #{unet_conv_block.3} parent=0 // pred_region
    _
  $region33: #{unet_conv_block.3} parent=0 // pred_fallthru
    _
  // Predicated region
  $region34: #{unet_conv_block.3} parent=0 // pred_check
    _
  $region35: #{unet_conv_block.3} parent=0 // pred_check_branch
    %352 = sbr.rel (0) target = $region37
  $region36: #{unet_conv_block.3} parent=0 // pred_region
    _
  $region37: #{unet_conv_block.3} parent=0 // pred_fallthru
    _

// kernel: unet_conv_block.4
$region0: #{unet_conv_block.4}
  #allocation0 [shape = 'u32[]', space=smem, size = 0x4, offset = 0x4, fixed_abs, tag = 'smem constant byte address 0x4 - core index']
  #allocation1 [shape = 'u32[72,128]{1,0:T(1,128)}', space=vmem, size = 0x9000, scoped, tag = 'internal scratch']
  %s0 = inlined_call_operand.vmem [shape: bf16[2,16,128], index: 0, kind: input, shape index: {}]
  %s1 = inlined_call_operand.vmem [shape: f32[2,1,128], index: 1, kind: input, shape index: {}]
  %s2 = inlined_call_operand.vmem [shape: f32[2,1,128], index: 2, kind: input, shape index: {}]
  %s3 = inlined_call_operand.vmem [shape: bf16[3,128,128], index: 3, kind: input, shape index: {}]
  %s4 = inlined_call_operand.vmem [shape: f32[1,128], index: 4, kind: input, shape index: {}]
  %s5 = inlined_call_operand.vmem [shape: bf16[2,16,128], index: 5, kind: output, shape index: {0}]
  %s6 = inlined_call_operand.vmem [shape: f32[1,1,128], index: 6, kind: output, shape index: {1}]
  %s7 = inlined_call_operand.vmem [shape: f32[1,1,128], index: 7, kind: output, shape index: {2}]
  %8 = xla_tuple %s5, %s6, %s7
  %s9 = sld [smem:[#allocation0]]
  $region46: #{unet_conv_block.4} parent=0
    _
  %s11 = ssub.s32 1, %s9
  %s12 = scalar_select 0, %s11, %s9
  // Predicated region
  $region2: #{unet_conv_block.4} parent=0 // pred_check
    _
  $region3: #{unet_conv_block.4} parent=0 // pred_check_branch
    %14 = sbr.rel (0) target = $region5
  $region4: #{unet_conv_block.4} parent=0 // pred_region
    _
  $region5: #{unet_conv_block.4} parent=0 // pred_fallthru
    _
  // Predicated region
  $region6: #{unet_conv_block.4} parent=0 // pred_check
    _
  $region7: #{unet_conv_block.4} parent=0 // pred_check_branch
    %16 = sbr.rel (0) target = $region9
  $region8: #{unet_conv_block.4} parent=0 // pred_region
    _
  $region9: #{unet_conv_block.4} parent=0 // pred_fallthru
    _
  // Predicated region
  $region10: #{unet_conv_block.4} parent=0 // pred_check
    _
  $region11: #{unet_conv_block.4} parent=0 // pred_check_branch
    %18 = sbr.rel (0) target = $region13
  $region12: #{unet_conv_block.4} parent=0 // pred_region
    _
  $region13: #{unet_conv_block.4} parent=0 // pred_fallthru
    _
  // Predicated region
  $region14: #{unet_conv_block.4} parent=0 // pred_check
    _
  $region15: #{unet_conv_block.4} parent=0 // pred_check_branch
    %20 = sbr.rel (0) target = $region17
  $region16: #{unet_conv_block.4} parent=0 // pred_region
    _
  $region17: #{unet_conv_block.4} parent=0 // pred_fallthru
    _
  // Predicated region
  $region18: #{unet_conv_block.4} parent=0 // pred_check
    _
  $region19: #{unet_conv_block.4} parent=0 // pred_check_branch
    %22 = sbr.rel (0) target = $region21
  $region20: #{unet_conv_block.4} parent=0 // pred_region
    _
  $region21: #{unet_conv_block.4} parent=0 // pred_fallthru
    _
  %v23 = vld [vmem:[%s0] sm:$0xf]
  %v24 = vld [vmem:[%s0 + $0x4] sm:$0xf]
  %v25 = vld [vmem:[%s0 + $0x8] sm:$0xf]
  %v26 = vld [vmem:[%s0 + $0xc] sm:$0xf]
  %v27 = vunpack.c.l.bf16 %v23
  %v28 = vunpack.c.l.bf16 %v24
  %v29 = vunpack.c.l.bf16 %v25
  %v30 = vunpack.c.l.bf16 %v26
  %v31 = vld [vmem:[%s1] sm:$0x1]
  %v32 = vld [vmem:[%s1 + $0x1] sm:$0x1]
  %v35 = vperm.slane %v31, 0
  %v36 = vperm.slane %v32, 0
  %v39 = vmul.f32 %v27, %v35
  %v40 = vmul.f32 %v28, %v35
  %v41 = vmul.f32 %v29, %v36
  %v42 = vmul.f32 %v30, %v36
  %v43 = vld [vmem:[%s2] sm:$0x1]
  %v44 = vld [vmem:[%s2 + $0x1] sm:$0x1]
  %v47 = vperm.slane %v43, 0
  %v48 = vperm.slane %v44, 0
  %v51 = vadd.f32 %v39, %v47
  %v52 = vadd.f32 %v40, %v47
  %v53 = vadd.f32 %v41, %v48
  %v54 = vadd.f32 %v42, %v48
  %v55 = vmax.f32 %v51, 0.0
  %v56 = vmax.f32 %v52, 0.0
  %v57 = vmax.f32 %v53, 0.0
  %v58 = vmax.f32 %v54, 0.0
  %v59 = vpack.c.bf16 %v55, %v55
  %v60 = vpack.c.bf16 %v56, %v56
  %v61 = vpack.c.bf16 %v57, %v57
  %v62 = vpack.c.bf16 %v58, %v58
  %s63 = scalar_lea.vmem %s3, 64
  %v64 = vld [vmem:[%s63] sm:$0xf]
  %v65 = vld [vmem:[%s63 + $0x4] sm:$0xf]
  %v66 = vld [vmem:[%s63 + $0x8] sm:$0xf]
  %v67 = vld [vmem:[%s63 + $0xc] sm:$0xf]
  %v68 = vld [vmem:[%s63 + $0x10] sm:$0xf]
  %v69 = vld [vmem:[%s63 + $0x14] sm:$0xf]
  %v70 = vld [vmem:[%s63 + $0x18] sm:$0xf]
  %v71 = vld [vmem:[%s63 + $0x1c] sm:$0xf]
  %v72 = vld [vmem:[%s63 + $0x20] sm:$0xf]
  %v73 = vld [vmem:[%s63 + $0x24] sm:$0xf]
  %v74 = vld [vmem:[%s63 + $0x28] sm:$0xf]
  %v75 = vld [vmem:[%s63 + $0x2c] sm:$0xf]
  %v76 = vld [vmem:[%s63 + $0x30] sm:$0xf]
  %v77 = vld [vmem:[%s63 + $0x34] sm:$0xf]
  %v78 = vld [vmem:[%s63 + $0x38] sm:$0xf]
  %v79 = vld [vmem:[%s63 + $0x3c] sm:$0xf]
  %v80 = vld [vmem:[%s3] sm:$0xf]
  %v81 = vld [vmem:[%s3 + $0x4] sm:$0xf]
  %v82 = vld [vmem:[%s3 + $0x8] sm:$0xf]
  %v83 = vld [vmem:[%s3 + $0xc] sm:$0xf]
  %v84 = vld [vmem:[%s3 + $0x10] sm:$0xf]
  %v85 = vld [vmem:[%s3 + $0x14] sm:$0xf]
  %v86 = vld [vmem:[%s3 + $0x18] sm:$0xf]
  %v87 = vld [vmem:[%s3 + $0x1c] sm:$0xf]
  %v88 = vld [vmem:[%s3 + $0x20] sm:$0xf]
  %v89 = vld [vmem:[%s3 + $0x24] sm:$0xf]
  %v90 = vld [vmem:[%s3 + $0x28] sm:$0xf]
  %v91 = vld [vmem:[%s3 + $0x2c] sm:$0xf]
  %v92 = vld [vmem:[%s3 + $0x30] sm:$0xf]
  %v93 = vld [vmem:[%s3 + $0x34] sm:$0xf]
  %v94 = vld [vmem:[%s3 + $0x38] sm:$0xf]
  %v95 = vld [vmem:[%s3 + $0x3c] sm:$0xf]
  %v100 = vunpack.c.l.b16 %v59
  %v101 = vunpack.c.l.b16 %v60
  %v102 = vunpack.c.l.b16 %v61
  %v103 = vunpack.c.l.b16 %v62
  %v104 = vpack.c.b16 %v101, %v100
  %v105 = vpack.c.b16 %v103, %v102
  %v124 = vunpack.c.l.b16 %v80
  %v125 = vunpack.c.l.b16 %v81
  %v126 = vunpack.c.l.b16 %v82
  %v127 = vunpack.c.l.b16 %v83
  %v128 = vunpack.c.l.b16 %v84
  %v129 = vunpack.c.l.b16 %v85
  %v130 = vunpack.c.l.b16 %v86
  %v131 = vunpack.c.l.b16 %v87
  %v132 = vunpack.c.l.b16 %v88
  %v133 = vunpack.c.l.b16 %v89
  %v134 = vunpack.c.l.b16 %v90
  %v135 = vunpack.c.l.b16 %v91
  %v136 = vunpack.c.l.b16 %v92
  %v137 = vunpack.c.l.b16 %v93
  %v138 = vunpack.c.l.b16 %v94
  %v139 = vunpack.c.l.b16 %v95
  %v140 = vpack.c.b16 %v125, %v124
  %v141 = vpack.c.b16 %v127, %v126
  %v142 = vpack.c.b16 %v129, %v128
  %v143 = vpack.c.b16 %v131, %v130
  %v144 = vpack.c.b16 %v133, %v132
  %v145 = vpack.c.b16 %v135, %v134
  %v146 = vpack.c.b16 %v137, %v136
  %v147 = vpack.c.b16 %v139, %v138
  %156 = vmatpush.bf16.msra.mxu0 %v147
  %157 = vmatpush.bf16.msra.mxu0 %v146
  %158 = vmatpush.bf16.msra.mxu0 %v145
  %159 = vmatpush.bf16.msra.mxu0 %v144
  %160 = vmatpush.bf16.msra.mxu0 %v143
  %161 = vmatpush.bf16.msra.mxu0 %v142
  %162 = vmatpush.bf16.msra.mxu0 %v141
  %163 = vmatpush.bf16.msra.mxu0 %v140
  %164 = vmatmul.bf16.gmra.mxu0 %v104
  %v165 = vpop.f32.mrf.mxu0
  %v166 = vadd.f32 0.0, %v165
  %v167 = vpop.f32.mrf.mxu0
  %v168 = vadd.f32 0.0, %v167
  %169 = vmatmul.bf16.gmra.mxu0 %v105
  %v170 = vpop.f32.mrf.mxu0
  %v171 = vadd.f32 0.0, %v170
  %v172 = vpop.f32.mrf.mxu0
  %v173 = vadd.f32 0.0, %v172
  %174 = vdwg.mxu0
  %s175 = scalar_lea.vmem %s3, 128
  %v176 = vld [vmem:[%s175] sm:$0xf]
  %v177 = vld [vmem:[%s175 + $0x4] sm:$0xf]
  %v178 = vld [vmem:[%s175 + $0x8] sm:$0xf]
  %v179 = vld [vmem:[%s175 + $0xc] sm:$0xf]
  %v180 = vld [vmem:[%s175 + $0x10] sm:$0xf]
  %v181 = vld [vmem:[%s175 + $0x14] sm:$0xf]
  %v182 = vld [vmem:[%s175 + $0x18] sm:$0xf]
  %v183 = vld [vmem:[%s175 + $0x1c] sm:$0xf]
  %v184 = vld [vmem:[%s175 + $0x20] sm:$0xf]
  %v185 = vld [vmem:[%s175 + $0x24] sm:$0xf]
  %v186 = vld [vmem:[%s175 + $0x28] sm:$0xf]
  %v187 = vld [vmem:[%s175 + $0x2c] sm:$0xf]
  %v188 = vld [vmem:[%s175 + $0x30] sm:$0xf]
  %v189 = vld [vmem:[%s175 + $0x34] sm:$0xf]
  %v190 = vld [vmem:[%s175 + $0x38] sm:$0xf]
  %v191 = vld [vmem:[%s175 + $0x3c] sm:$0xf]
  %v208 = vunpack.c.l.b16 %v176
  %v209 = vunpack.c.l.b16 %v177
  %v210 = vunpack.c.l.b16 %v178
  %v211 = vunpack.c.l.b16 %v179
  %v212 = vunpack.c.l.b16 %v180
  %v213 = vunpack.c.l.b16 %v181
  %v214 = vunpack.c.l.b16 %v182
  %v215 = vunpack.c.l.b16 %v183
  %v216 = vunpack.c.l.b16 %v184
  %v217 = vunpack.c.l.b16 %v185
  %v218 = vunpack.c.l.b16 %v186
  %v219 = vunpack.c.l.b16 %v187
  %v220 = vunpack.c.l.b16 %v188
  %v221 = vunpack.c.l.b16 %v189
  %v222 = vunpack.c.l.b16 %v190
  %v223 = vunpack.c.l.b16 %v191
  %v224 = vpack.c.b16 %v209, %v208
  %v225 = vpack.c.b16 %v211, %v210
  %v226 = vpack.c.b16 %v213, %v212
  %v227 = vpack.c.b16 %v215, %v214
  %v228 = vpack.c.b16 %v217, %v216
  %v229 = vpack.c.b16 %v219, %v218
  %v230 = vpack.c.b16 %v221, %v220
  %v231 = vpack.c.b16 %v223, %v222
  %240 = vmatpush.bf16.msra.mxu0 %v231
  %241 = vmatpush.bf16.msra.mxu0 %v230
  %242 = vmatpush.bf16.msra.mxu0 %v229
  %243 = vmatpush.bf16.msra.mxu0 %v228
  %244 = vmatpush.bf16.msra.mxu0 %v227
  %245 = vmatpush.bf16.msra.mxu0 %v226
  %246 = vmatpush.bf16.msra.mxu0 %v225
  %247 = vmatpush.bf16.msra.mxu0 %v224
  %248 = vmatmul.bf16.gmra.mxu0 %v104
  %v249 = vpop.f32.mrf.mxu0
  %v250 = vadd.f32 0.0, %v249
  %v251 = vpop.f32.mrf.mxu0
  %v252 = vadd.f32 0.0, %v251
  %253 = vmatmul.bf16.gmra.mxu0 %v105
  %v254 = vpop.f32.mrf.mxu0
  %v255 = vadd.f32 0.0, %v254
  %v256 = vpop.f32.mrf.mxu0
  %v257 = vadd.f32 0.0, %v256
  %258 = vdwg.mxu0
  %vm263 = vcmask 1040384
  %v264 = vrot.slane %v166, 7
  %v265 = vrot.slane %v168, 7
  %v266 = vsel %vm263, %v264, %v265
  %v267 = vrot.slane %v171, 7
  %v268 = vsel %vm263, %v265, %v267
  %v269 = vrot.slane %v173, 7
  %v270 = vsel %vm263, %v267, %v269
  %v275 = vsel %vm263, 0.0, %v264
  %vm280 = vcmask 1046528
  %v281 = vrot.slane %v250, 1
  %v282 = vrot.slane %v252, 1
  %v283 = vsel %vm280, %v281, %v282
  %v284 = vrot.slane %v255, 1
  %v285 = vsel %vm280, %v282, %v284
  %v286 = vrot.slane %v257, 1
  %v287 = vsel %vm280, %v284, %v286
  %v292 = vsel %vm280, %v286, 0.0
  %v293 = vlaneseq
  %v294 = vshrl.u32 %v293, 7
  %v295 = vadd.s32 %v294, 8
  %v296 = vadd.s32 %v294, 16
  %v297 = vadd.s32 %v294, 24
  %vm298 = vcmp.lt.s32.totalorder %v294, 0
  %v299 = vsub.s32 0, %v294
  %v300 = vsel %vm298, %v299, %v294
  %v301 = vshrl.u32 %v300, 4
  %v302 = vand.u32 %v300, 15
  %v303 = vsub.s32 0, %v302
  %v304 = vsel %vm298, %v303, %v302
  %vm305 = vcmp.lt.s32.totalorder %v295, 0
  %v306 = vsub.s32 0, %v295
  %v307 = vsel %vm305, %v306, %v295
  %v308 = vshrl.u32 %v307, 4
  %v309 = vand.u32 %v307, 15
  %v310 = vsub.s32 0, %v309
  %v311 = vsel %vm305, %v310, %v309
  %vm312 = vcmp.lt.s32.totalorder %v296, 0
  %v313 = vsub.s32 0, %v296
  %v314 = vsel %vm312, %v313, %v296
  %v315 = vshrl.u32 %v314, 4
  %v316 = vand.u32 %v314, 15
  %v317 = vsub.s32 0, %v316
  %v318 = vsel %vm312, %v317, %v316
  %vm319 = vcmp.lt.s32.totalorder %v297, 0
  %v320 = vsub.s32 0, %v297
  %v321 = vsel %vm319, %v320, %v297
  %v322 = vshrl.u32 %v321, 4
  %v323 = vand.u32 %v321, 15
  %v324 = vsub.s32 0, %v323
  %v325 = vsel %vm319, %v324, %v323
  %vm326 = vcmp.ne.s32.totalorder %v304, 0
  %vm327 = vcmp.ne.s32.totalorder %v311, 0
  %vm328 = vcmp.ne.s32.totalorder %v318, 0
  %vm329 = vcmp.ne.s32.totalorder %v325, 0
  %vm330 = vcmp.lt.s32.totalorder %v304, 0
  %vm331 = vcmp.lt.s32.totalorder %v311, 0
  %vm332 = vcmp.lt.s32.totalorder %v318, 0
  %vm333 = vcmp.lt.s32.totalorder %v325, 0
  %vm334 = vmand %vm330, %vm326
  %vm335 = vmand %vm331, %vm327
  %vm336 = vmand %vm332, %vm328
  %vm337 = vmand %vm333, %vm329
  %v338 = vadd.s32 %v304, 16
  %v339 = vadd.s32 %v311, 16
  %v340 = vadd.s32 %v318, 16
  %v341 = vadd.s32 %v325, 16
  %v342 = vsel %vm334, %v338, %v304
  %v343 = vsel %vm335, %v339, %v311
  %v344 = vsel %vm336, %v340, %v318
  %v345 = vsel %vm337, %v341, %v325
  %vm346 = vcmp.ne.s32.totalorder %v342, 0
  %vm347 = vcmp.ne.s32.totalorder %v343, 0
  %vm348 = vcmp.ne.s32.totalorder %v344, 0
  %vm349 = vcmp.ne.s32.totalorder %v345, 0
  %v350 = vsel %vm346, %v275, 0.0
  %v351 = vsel %vm347, %v266, 0.0
  %v352 = vsel %vm348, %v268, 0.0
  %v353 = vsel %vm349, %v270, 0.0
  %vm354 = vcmp.ne.s32.totalorder %v342, 15
  %vm355 = vcmp.ne.s32.totalorder %v343, 15
  %vm356 = vcmp.ne.s32.totalorder %v344, 15
  %vm357 = vcmp.ne.s32.totalorder %v345, 15
  %v358 = vsel %vm354, %v283, 0.0
  %v359 = vsel %vm355, %v285, 0.0
  %v360 = vsel %vm356, %v287, 0.0
  %v361 = vsel %vm357, %v292, 0.0
  %v378 = vunpack.c.l.b16 %v64
  %v379 = vunpack.c.l.b16 %v65
  %v380 = vunpack.c.l.b16 %v66
  %v381 = vunpack.c.l.b16 %v67
  %v382 = vunpack.c.l.b16 %v68
  %v383 = vunpack.c.l.b16 %v69
  %v384 = vunpack.c.l.b16 %v70
  %v385 = vunpack.c.l.b16 %v71
  %v386 = vunpack.c.l.b16 %v72
  %v387 = vunpack.c.l.b16 %v73
  %v388 = vunpack.c.l.b16 %v74
  %v389 = vunpack.c.l.b16 %v75
  %v390 = vunpack.c.l.b16 %v76
  %v391 = vunpack.c.l.b16 %v77
  %v392 = vunpack.c.l.b16 %v78
  %v393 = vunpack.c.l.b16 %v79
  %v394 = vpack.c.b16 %v379, %v378
  %v395 = vpack.c.b16 %v381, %v380
  %v396 = vpack.c.b16 %v383, %v382
  %v397 = vpack.c.b16 %v385, %v384
  %v398 = vpack.c.b16 %v387, %v386
  %v399 = vpack.c.b16 %v389, %v388
  %v400 = vpack.c.b16 %v391, %v390
  %v401 = vpack.c.b16 %v393, %v392
  %410 = vmatpush.bf16.msra.mxu0 %v401
  %411 = vmatpush.bf16.msra.mxu0 %v400
  %412 = vmatpush.bf16.msra.mxu0 %v399
  %413 = vmatpush.bf16.msra.mxu0 %v398
  %414 = vmatpush.bf16.msra.mxu0 %v397
  %415 = vmatpush.bf16.msra.mxu0 %v396
  %416 = vmatpush.bf16.msra.mxu0 %v395
  %417 = vmatpush.bf16.msra.mxu0 %v394
  %418 = vmatmul.bf16.gmra.mxu0 %v104
  %v419 = vpop.f32.mrf.mxu0
  %v420 = vadd.f32 %v350, %v419
  %v421 = vpop.f32.mrf.mxu0
  %v422 = vadd.f32 %v351, %v421
  %423 = vmatmul.bf16.gmra.mxu0 %v105
  %v424 = vpop.f32.mrf.mxu0
  %v425 = vadd.f32 %v352, %v424
  %v426 = vpop.f32.mrf.mxu0
  %v427 = vadd.f32 %v353, %v426
  %428 = vdwg.mxu0
  %v429 = vadd.f32 %v420, %v358
  %v430 = vadd.f32 %v422, %v359
  %v431 = vadd.f32 %v425, %v360
  %v432 = vadd.f32 %v427, %v361
  %v433 = vld [vmem:[%s4] sm:$0x1]
  %v435 = vperm.slane %v433, 0
  %v437 = vadd.f32 %v429, %v435
  %v438 = vadd.f32 %v430, %v435
  %v439 = vadd.f32 %v431, %v435
  %v440 = vadd.f32 %v432, %v435
  %v441 = vpack.c.bf16 %v437, %v437
  %v442 = vpack.c.bf16 %v438, %v438
  %v443 = vpack.c.bf16 %v439, %v439
  %v444 = vpack.c.bf16 %v440, %v440
  %445 = vst [vmem:[%s5] sm:$0xf] %v441
  %446 = vst [vmem:[%s5 + $0x4] sm:$0xf] %v442
  %447 = vst [vmem:[%s5 + $0x8] sm:$0xf] %v443
  %448 = vst [vmem:[%s5 + $0xc] sm:$0xf] %v444
  %v449 = vadd.f32 %v437, %v438
  %v450 = vadd.f32 %v449, %v439
  %v451 = vadd.f32 %v450, %v440
  %v452 = vrot.slane %v451, 4
  %v453 = vadd.f32 %v451, %v452
  %v454 = vrot.slane %v453, 2
  %v455 = vadd.f32 %v453, %v454
  %v456 = vrot.slane %v455, 1
  %v457 = vadd.f32 %v455, %v456
  %458 = vst [vmem:[%s6] sm:$0x1] %v457
  %v459 = vmul.f32 %v437, %v437
  %v460 = vmul.f32 %v438, %v438
  %v461 = vmul.f32 %v439, %v439
  %v462 = vmul.f32 %v440, %v440
  %v463 = vadd.f32 %v459, %v460
  %v464 = vadd.f32 %v463, %v461
  %v465 = vadd.f32 %v464, %v462
  %v466 = vrot.slane %v465, 4
  %v467 = vadd.f32 %v465, %v466
  %v468 = vrot.slane %v467, 2
  %v469 = vadd.f32 %v467, %v468
  %v470 = vrot.slane %v469, 1
  %v471 = vadd.f32 %v469, %v470
  %472 = vst [vmem:[%s7] sm:$0x1] %v471
  // Predicated region
  $region22: #{unet_conv_block.4} parent=0 // pred_check
    _
  $region23: #{unet_conv_block.4} parent=0 // pred_check_branch
    %474 = sbr.rel (0) target = $region25
  $region24: #{unet_conv_block.4} parent=0 // pred_region
    _
  $region25: #{unet_conv_block.4} parent=0 // pred_fallthru
    _
  // Predicated region
  $region26: #{unet_conv_block.4} parent=0 // pred_check
    _
  $region27: #{unet_conv_block.4} parent=0 // pred_check_branch
    %476 = sbr.rel (0) target = $region29
  $region28: #{unet_conv_block.4} parent=0 // pred_region
    _
  $region29: #{unet_conv_block.4} parent=0 // pred_fallthru
    _
  // Predicated region
  $region30: #{unet_conv_block.4} parent=0 // pred_check
    _
  $region31: #{unet_conv_block.4} parent=0 // pred_check_branch
    %478 = sbr.rel (0) target = $region33
  $region32: #{unet_conv_block.4} parent=0 // pred_region
    _
  $region33: #{unet_conv_block.4} parent=0 // pred_fallthru
    _
  // Predicated region
  $region34: #{unet_conv_block.4} parent=0 // pred_check
    _
  $region35: #{unet_conv_block.4} parent=0 // pred_check_branch
    %480 = sbr.rel (0) target = $region37
  $region36: #{unet_conv_block.4} parent=0 // pred_region
    _
  $region37: #{unet_conv_block.4} parent=0 // pred_fallthru
    _
  // Predicated region
  $region38: #{unet_conv_block.4} parent=0 // pred_check
    _
  $region39: #{unet_conv_block.4} parent=0 // pred_check_branch
    %482 = sbr.rel (0) target = $region41
  $region40: #{unet_conv_block.4} parent=0 // pred_region
    _
  $region41: #{unet_conv_block.4} parent=0 // pred_fallthru
    _
  // Predicated region
  $region42: #{unet_conv_block.4} parent=0 // pred_check
    _
  $region43: #{unet_conv_block.4} parent=0 // pred_check_branch
    %484 = sbr.rel (0) target = $region45
  $region44: #{unet_conv_block.4} parent=0 // pred_region
    _
  $region45: #{unet_conv_block.4} parent=0 // pred_fallthru
    _

</llo_original>
